<compile_context>
chip_gen: v6e
topology: v6e:2x2x1
jax: 0.10.0
libtpu: 0.0.40
codegen_flags: <defaults>
</compile_context>

<pallas_src>
import math

import jax
import jax.numpy as jnp
from jax.experimental import pallas as pl
from jax.experimental.pallas import tpu as pltpu


def _exp_normal_smearing_kernel(cut_ref, expd_ref, means_ref, neg_betas_ref, out_ref):
    cut = cut_ref[...]                                   # (TE, 1)  f32; 0 past cutoff / pad rows
    diff = expd_ref[...] - means_ref[...]                # (TE, R)  broadcast across lanes
    rbf = jnp.exp(neg_betas_ref[...] * (diff * diff))    # (TE, R)  lane-dense EUP exp
    out_ref[...] = (cut * rbf).astype(out_ref.dtype)     # (TE, R)  lane-dense store


def _round_up(x: int, m: int) -> int:
    return ((x + m - 1) // m) * m


def exp_normal_smearing(dist: jax.Array,
                        means: jax.Array,
                        betas: jax.Array,
                        cutoff: float = 5.0,
                        *,
                        tile_e: int = 4096,
                        out_dtype=jnp.float32) -> jax.Array:
    """dist: [E] f32, means/betas: [num_rbf] f32 -> [E, num_rbf] (out_dtype)."""
    E = dist.shape[0]
    R = means.shape[0]
    alpha = 5.0 / float(cutoff)

    # Sublane granularity: 8 rows for f32 output, 16 for bf16 (sublane packing).
    sub = 16 if jnp.dtype(out_dtype) == jnp.dtype(jnp.bfloat16) else 8
    tile_e = max(sub, (int(tile_e) // sub) * sub)
    tile_e = min(tile_e, _round_up(E, sub))          # don't over-pad tiny inputs

    # If everything fits in one grid step but E is non-trivial, split in two so the
    # "parallel" grid axis can shard across both TensorCores on v7x (costs ~0.35 us
    # on single-TC chips, negligible).
    if E >= 2048 and _round_up(E, sub) <= tile_e:
        tile_e = _round_up((E + 1) // 2, sub)

    n_blocks = pl.cdiv(E, tile_e)
    E_pad = n_blocks * tile_e

    dist = dist.astype(jnp.float32)

    # Lane-dense per-edge precompute (one fused elementwise XLA op over [E]):
    cut = 0.5 * (jnp.cos(dist * (math.pi / float(cutoff))) + 1.0)
    cut = cut * (dist < cutoff).astype(jnp.float32)
    expd = jnp.exp((-alpha) * dist)

    if E_pad != E:
        pad = E_pad - E
        cut = jnp.pad(cut, (0, pad))                 # cut=0 -> padded output rows are 0
        expd = jnp.pad(expd, (0, pad))

    cut2d = cut.reshape(E_pad, 1)
    expd2d = expd.reshape(E_pad, 1)
    means2d = means.reshape(1, R).astype(jnp.float32)
    neg_betas2d = (-betas).reshape(1, R).astype(jnp.float32)

    # Raise scoped VMEM only if the double-buffered blocks need it (v5e: 16 MiB default).
    out_itemsize = jnp.dtype(out_dtype).itemsize
    vmem_needed = (2 * tile_e * R * out_itemsize      # output double buffer
                   + 2 * 2 * tile_e * 4               # two per-edge columns, double-buffered
                   + 2 * 2 * R * 4                    # means / -betas
                   + (1 << 20))                       # slack
    cp_kwargs = dict(dimension_semantics=("parallel",))
    if vmem_needed > (16 << 20):
        cp_kwargs["vmem_limit_bytes"] = int(vmem_needed)

    out = pl.pallas_call(
        _exp_normal_smearing_kernel,
        out_shape=jax.ShapeDtypeStruct((E_pad, R), out_dtype),
        grid_spec=pltpu.PrefetchScalarGridSpec(
            num_scalar_prefetch=0,
            grid=(n_blocks,),
            in_specs=[
                pl.BlockSpec((tile_e, 1), lambda i: (i, 0)),   # cosine cutoff column
                pl.BlockSpec((tile_e, 1), lambda i: (i, 0)),   # exp(-alpha*d) column
                pl.BlockSpec((1, R), lambda i: (0, 0)),        # means (grid-resident)
                pl.BlockSpec((1, R), lambda i: (0, 0)),        # -betas (grid-resident)
            ],
            out_specs=pl.BlockSpec((tile_e, R), lambda i: (i, 0)),
        ),
        compiler_params=pltpu.CompilerParams(**cp_kwargs),
    )(cut2d, expd2d, means2d, neg_betas2d)

    if E_pad != E:
        out = out[:E]
    return out


def make_params(cutoff: float = 5.0, num_rbf: int = 128):
    """Deterministic init matching ExpNormalSmearing._initial_params."""
    start_value = math.exp(-cutoff)
    means = jnp.linspace(start_value, 1.0, num_rbf, dtype=jnp.float32)
    betas = jnp.full((num_rbf,),
                     (2.0 / num_rbf * (1.0 - start_value)) ** (-2),
                     dtype=jnp.float32)
    return means, betas


def _reference(dist, means, betas, cutoff):
    alpha = 5.0 / cutoff
    d = dist[:, None]
    cut = 0.5 * (jnp.cos(d * math.pi / cutoff) + 1.0) * (d < cutoff).astype(jnp.float32)
    return cut * jnp.exp(-betas[None, :] * (jnp.exp(-alpha * d) - means[None, :]) ** 2)


if __name__ == "__main__":
    cutoff = 5.0
    key = jax.random.PRNGKey(0)

    # Primary check: module default num_rbf=128 (lane-dense output), E not a tile
    # multiple, multi-step grid (tile_e=1024 -> 3 grid steps with a padded tail).
    E, num_rbf = 3000, 128
    dist = jax.random.uniform(key, (E,), jnp.float32, minval=0.0, maxval=1.2 * cutoff)
    means, betas = make_params(cutoff, num_rbf)

    out = exp_normal_smearing(dist, means, betas, cutoff, tile_e=1024)
    out = jax.block_until_ready(out)

    ref = _reference(dist, means, betas, cutoff)
    assert out.shape == (E, num_rbf)
    assert jnp.allclose(out, ref, atol=1e-5, rtol=1e-5), "mismatch vs reference (R=128)"

    # Default-tile path (single pallas_call config most users hit).
    out_d = jax.block_until_ready(exp_normal_smearing(dist, means, betas, cutoff))
    assert jnp.allclose(out_d, ref, atol=1e-5, rtol=1e-5), "mismatch vs reference (default tile)"

    # Secondary check: smaller num_rbf (common visnet setting) and an odd edge count.
    E2, R2 = 555, 64
    dist2 = jax.random.uniform(jax.random.PRNGKey(0), (E2,), jnp.float32,
                               minval=0.0, maxval=1.2 * cutoff)
    means2, betas2 = make_params(cutoff, R2)
    out2 = jax.block_until_ready(exp_normal_smearing(dist2, means2, betas2, cutoff))
    ref2 = _reference(dist2, means2, betas2, cutoff)
    assert out2.shape == (E2, R2)
    assert jnp.allclose(out2, ref2, atol=1e-5, rtol=1e-5), "mismatch vs reference (R=64)"

    print("KERNEL_OK")
</pallas_src>

<mosaic_0001>
module attributes {stable_mosaic.version = 11 : i64} {
  func.func @_exp_normal_smearing_kernel(%arg0: i32, %arg1: memref<1024x1xf32, #tpu.memory_space<vmem>>, %arg2: memref<1024x1xf32, #tpu.memory_space<vmem>>, %arg3: memref<1x128xf32, #tpu.memory_space<vmem>>, %arg4: memref<1x128xf32, #tpu.memory_space<vmem>>, %arg5: memref<1024x128xf32, #tpu.memory_space<vmem>>) attributes {dimension_semantics = [#tpu.dimension_semantics<parallel>], iteration_bounds = array<i64: 3>, scalar_prefetch = 0 : i64, scratch_operands = 0 : i64, tpu.core_type = #tpu.core_type<tc>, window_params = [{transform_indices = @transform_0, window_bounds = array<i64: 1024, 1>}, {transform_indices = @transform_1, window_bounds = array<i64: 1024, 1>}, {pipeline_mode = #tpu.pipeline_mode<synchronous>, transform_indices = @transform_2, window_bounds = array<i64: 1, 128>}, {pipeline_mode = #tpu.pipeline_mode<synchronous>, transform_indices = @transform_3, window_bounds = array<i64: 1, 128>}, {transform_indices = @transform_4, window_bounds = array<i64: 1024, 128>}]} {
    %c0 = arith.constant 0 : index
    %c0_0 = arith.constant 0 : index
    %0 = vector.load %arg1[%c0, %c0_0] : memref<1024x1xf32, #tpu.memory_space<vmem>>, vector<1024x1xf32>
    %c0_1 = arith.constant 0 : index
    %c0_2 = arith.constant 0 : index
    %1 = vector.load %arg2[%c0_1, %c0_2] : memref<1024x1xf32, #tpu.memory_space<vmem>>, vector<1024x1xf32>
    %c0_3 = arith.constant 0 : index
    %c0_4 = arith.constant 0 : index
    %2 = vector.load %arg3[%c0_3, %c0_4] : memref<1x128xf32, #tpu.memory_space<vmem>>, vector<1x128xf32>
    %3 = vector.broadcast %1 : vector<1024x1xf32> to vector<1024x128xf32>
    %4 = vector.broadcast %2 : vector<1x128xf32> to vector<1024x128xf32>
    %5 = arith.subf %3, %4 : vector<1024x128xf32>
    %c0_5 = arith.constant 0 : index
    %c0_6 = arith.constant 0 : index
    %6 = vector.load %arg4[%c0_5, %c0_6] : memref<1x128xf32, #tpu.memory_space<vmem>>, vector<1x128xf32>
    %7 = arith.mulf %5, %5 : vector<1024x128xf32>
    %8 = vector.broadcast %6 : vector<1x128xf32> to vector<1024x128xf32>
    %9 = arith.mulf %8, %7 : vector<1024x128xf32>
    %10 = math.exp %9 : vector<1024x128xf32>
    %11 = vector.broadcast %0 : vector<1024x1xf32> to vector<1024x128xf32>
    %12 = arith.mulf %11, %10 : vector<1024x128xf32>
    %c0_7 = arith.constant 0 : index
    %c0_8 = arith.constant 0 : index
    %13 = vector.load %arg5[%c0_7, %c0_8] : memref<1024x128xf32, #tpu.memory_space<vmem>>, vector<1024x128xf32>
    tpu.vector_store %arg5[%c0_7, %c0_8], %12 {strides = array<i32>} : memref<1024x128xf32, #tpu.memory_space<vmem>>, vector<1024x128xf32>,
    return
  }
  func.func @transform_0(%arg0: i32) -> (i32, i32) {
    %c0_i32 = arith.constant 0 : i32
    %c0_i32_0 = arith.constant 0 : i32
    return %arg0, %c0_i32 : i32, i32
  }
  func.func @transform_1(%arg0: i32) -> (i32, i32) {
    %c0_i32 = arith.constant 0 : i32
    %c0_i32_0 = arith.constant 0 : i32
    return %arg0, %c0_i32 : i32, i32
  }
  func.func @transform_2(%arg0: i32) -> (i32, i32) {
    %c0_i32 = arith.constant 0 : i32
    %c0_i32_0 = arith.constant 0 : i32
    %c0_i32_1 = arith.constant 0 : i32
    return %c0_i32, %c0_i32_0 : i32, i32
  }
  func.func @transform_3(%arg0: i32) -> (i32, i32) {
    %c0_i32 = arith.constant 0 : i32
    %c0_i32_0 = arith.constant 0 : i32
    %c0_i32_1 = arith.constant 0 : i32
    return %c0_i32, %c0_i32_0 : i32, i32
  }
  func.func @transform_4(%arg0: i32) -> (i32, i32) {
    %c0_i32 = arith.constant 0 : i32
    %c0_i32_0 = arith.constant 0 : i32
    return %arg0, %c0_i32 : i32, i32
  }
}

</mosaic_0001>

<llo_original>
// kernel: tpu_custom_call.1
$region0: #{tpu_custom_call.1}
  #allocation0 [shape = 'u32[]', space=smem, size = 0x4, offset = 0x4, fixed_abs, tag = 'smem constant byte address 0x4 - core index']
  #allocation1 [shape = 'u32[144,128]{1,0:T(1,128)}', space=vmem, size = 0x12000, scoped, tag = 'internal scratch']
  %s0 = inlined_call_operand.vmem [shape: f32[3072,1], index: 0, kind: input, shape index: {}]
  %s1 = inlined_call_operand.vmem [shape: f32[3072,1], index: 1, kind: input, shape index: {}]
  %s2 = inlined_call_operand.vmem [shape: f32[1,128], index: 2, kind: input, shape index: {}]
  %s3 = inlined_call_operand.vmem [shape: f32[1,128], index: 3, kind: input, shape index: {}]
  %s4 = inlined_call_operand.hbm [shape: f32[3072,128], index: 4, kind: output, shape index: {}]
  %s5 = sld [smem:[#allocation0]]
  $region49: #{tpu_custom_call.1} parent=0
    _
  %s7 = ssub.s32 1, %s5
  %s8 = scalar_select 0, %s7, %s5
  $region1: #{tpu_custom_call.1} parent=0
    #allocation2 [shape = 'u8[1048576]{0}', space=vmem, size = 0x100000, scoped, tag = 'output window, operand 0']
    #allocation3 [shape = 's32[2]{0}', space=sflag, size = 0x8, scoped, tag = 'scoped memory for tpu_custom_call.1']
    %9 = vsyncpa [#allocation3], 0
    %s10 = scalar_lea.sflag [#allocation3], 1
    %11 = vsyncpa %s10, 0
    loop: start=0, step=1, limit=5
    $region2: #{tpu_custom_call.1} parent=1 // loop_pre_header
      _
    $region3: #{tpu_custom_call.1} parent=1 // loop_header
      %s13 = sphi 0, %s17
      %p14 = scmp.ge.s32.totalorder %s13, 5
      %s23 = sphi 0, %s25
      %s26 = sphi 0, %s23
      %s27 = sphi 0, %s26
      %s43 = sphi 0, %s27
      %s49 = sphi 0, %s51
      %s52 = sphi 0, %s49
      %s53 = sphi 0, %s52
      %s69 = sphi 0, %s53
      %s73 = sphi 0, %s73
      %s75 = sphi 0, %s73
      %s76 = sphi 0, %s75
      %s90 = sphi 0, %s76
      %s94 = sphi 0, %s94
      %s96 = sphi 0, %s94
      %s97 = sphi 0, %s96
      %s111 = sphi 0, %s97
      %s117 = sphi 0, %s119
      %s120 = sphi 0, %s117
      %s121 = sphi 0, %s120
      %s137 = sphi 0, %s121
    $region4: #{tpu_custom_call.1} parent=1 // loop_header_branch
      %16 = sbr.rel (%p14) target = $region8
    $region5: #{tpu_custom_call.1} parent=1 // loop_body
      %s18 = ssub.s32 %s13, 1
      %s19 = ssub.s32 %s13, 2
      %s20 = sadd.s32 %s13, 1
      %s21 = ssub.s32 %s13, %s20
      %p22 = scmp.eq.s32.totalorder %s21, 0
      %s24 = sadd.s32 %s23, 1
      %s25 = scalar_select %p22, %s23, %s24
      %p28 = pneg %p22
      %p29 = scmp.eq.s32.totalorder %s13, 2
      %p30 = por %p28, %p29
      %p31 = scmp.ne.s32.totalorder %s23, %s26
      %p32 = scmp.eq.s32.totalorder %s13, 0
      %p33 = por %p31, %p32
      %p34 = scmp.ne.s32.totalorder %s23, %s26
      %p35 = scmp.eq.s32.totalorder %s18, 2
      %p36 = por %p34, %p35
      %p37 = scmp.ne.s32.totalorder %s26, %s27
      %p38 = scmp.eq.s32.totalorder %s18, 0
      %p39 = por %p37, %p38
      %p40 = scmp.ne.s32.totalorder %s26, %s27
      %p41 = scmp.eq.s32.totalorder %s19, 2
      %p42 = por %p40, %p41
      %p44 = scmp.ne.s32.totalorder %s27, %s43
      %p45 = scmp.eq.s32.totalorder %s19, 0
      %p46 = por %p44, %p45
      %s47 = ssub.s32 %s13, %s20
      %p48 = scmp.eq.s32.totalorder %s47, 0
      %s50 = sadd.s32 %s49, 1
      %s51 = scalar_select %p48, %s49, %s50
      %p54 = pneg %p48
      %p55 = scmp.eq.s32.totalorder %s13, 2
      %p56 = por %p54, %p55
      %p57 = scmp.ne.s32.totalorder %s49, %s52
      %p58 = scmp.eq.s32.totalorder %s13, 0
      %p59 = por %p57, %p58
      %p60 = scmp.ne.s32.totalorder %s49, %s52
      %p61 = scmp.eq.s32.totalorder %s18, 2
      %p62 = por %p60, %p61
      %p63 = scmp.ne.s32.totalorder %s52, %s53
      %p64 = scmp.eq.s32.totalorder %s18, 0
      %p65 = por %p63, %p64
      %p66 = scmp.ne.s32.totalorder %s52, %s53
      %p67 = scmp.eq.s32.totalorder %s19, 2
      %p68 = por %p66, %p67
      %p70 = scmp.ne.s32.totalorder %s53, %s69
      %p71 = scmp.eq.s32.totalorder %s19, 0
      %p72 = por %p70, %p71
      %s74 = sadd.s32 %s73, 1
      %p77 = scmp.eq.s32.totalorder %s13, 2
      %p78 = scmp.ne.s32.totalorder %s73, %s75
      %p79 = scmp.eq.s32.totalorder %s13, 0
      %p80 = por %p78, %p79
      %p81 = scmp.ne.s32.totalorder %s73, %s75
      %p82 = scmp.eq.s32.totalorder %s18, 2
      %p83 = por %p81, %p82
      %p84 = scmp.ne.s32.totalorder %s75, %s76
      %p85 = scmp.eq.s32.totalorder %s18, 0
      %p86 = por %p84, %p85
      %p87 = scmp.ne.s32.totalorder %s75, %s76
      %p88 = scmp.eq.s32.totalorder %s19, 2
      %p89 = por %p87, %p88
      %p91 = scmp.ne.s32.totalorder %s76, %s90
      %p92 = scmp.eq.s32.totalorder %s19, 0
      %p93 = por %p91, %p92
      %s95 = sadd.s32 %s94, 1
      %p98 = scmp.eq.s32.totalorder %s13, 2
      %p99 = scmp.ne.s32.totalorder %s94, %s96
      %p100 = scmp.eq.s32.totalorder %s13, 0
      %p101 = por %p99, %p100
      %p102 = scmp.ne.s32.totalorder %s94, %s96
      %p103 = scmp.eq.s32.totalorder %s18, 2
      %p104 = por %p102, %p103
      %p105 = scmp.ne.s32.totalorder %s96, %s97
      %p106 = scmp.eq.s32.totalorder %s18, 0
      %p107 = por %p105, %p106
      %p108 = scmp.ne.s32.totalorder %s96, %s97
      %p109 = scmp.eq.s32.totalorder %s19, 2
      %p110 = por %p108, %p109
      %p112 = scmp.ne.s32.totalorder %s97, %s111
      %p113 = scmp.eq.s32.totalorder %s19, 0
      %p114 = por %p112, %p113
      %s115 = ssub.s32 %s13, %s20
      %p116 = scmp.eq.s32.totalorder %s115, 0
      %s118 = sadd.s32 %s117, 1
      %s119 = scalar_select %p116, %s117, %s118
      %p122 = pneg %p116
      %p123 = scmp.eq.s32.totalorder %s13, 2
      %p124 = por %p122, %p123
      %p125 = scmp.ne.s32.totalorder %s117, %s120
      %p126 = scmp.eq.s32.totalorder %s13, 0
      %p127 = por %p125, %p126
      %p128 = scmp.ne.s32.totalorder %s117, %s120
      %p129 = scmp.eq.s32.totalorder %s18, 2
      %p130 = por %p128, %p129
      %p131 = scmp.ne.s32.totalorder %s120, %s121
      %p132 = scmp.eq.s32.totalorder %s18, 0
      %p133 = por %p131, %p132
      %p134 = scmp.ne.s32.totalorder %s120, %s121
      %p135 = scmp.eq.s32.totalorder %s19, 2
      %p136 = por %p134, %p135
      %p138 = scmp.ne.s32.totalorder %s121, %s137
      %p139 = scmp.eq.s32.totalorder %s19, 0
      %p140 = por %p138, %p139
      %p141 = scmp.le.s32.totalorder 1, %s13
      %p142 = scmp.lt.s32.totalorder %s13, 4
      %p143 = pnand %p141, %p142
      %p144 = pneg %p143
      // Predicated region
      $region9: #{tpu_custom_call.1} parent=5 // pred_check
        _
      $region10: #{tpu_custom_call.1} parent=5 // pred_check_branch
        %146 = sbr.rel (%p143) target = $region12
      $region11: #{tpu_custom_call.1} parent=5 // pred_region
        %s147 = ssub.s32 %s13, 1
        // Predicated region
        $region13: #{tpu_custom_call.1} parent=11 // pred_check
          %p148 = pneg %p86
        $region14: #{tpu_custom_call.1} parent=11 // pred_check_branch
          %150 = sbr.rel (%p148) target = $region16
        $region15: #{tpu_custom_call.1} parent=11 // pred_region
          _
        $region16: #{tpu_custom_call.1} parent=11 // pred_fallthru
          _
        // Predicated region
        $region17: #{tpu_custom_call.1} parent=11 // pred_check
          %p151 = pneg %p107
        $region18: #{tpu_custom_call.1} parent=11 // pred_check_branch
          %153 = sbr.rel (%p151) target = $region20
        $region19: #{tpu_custom_call.1} parent=11 // pred_region
          _
        $region20: #{tpu_custom_call.1} parent=11 // pred_fallthru
          _
      $region12: #{tpu_custom_call.1} parent=5 // pred_fallthru
        _
      %p154 = scmp.lt.s32.totalorder %s13, 3
      // Predicated region
      $region21: #{tpu_custom_call.1} parent=5 // pred_check
        %p155 = pneg %p154
      $region22: #{tpu_custom_call.1} parent=5 // pred_check_branch
        %157 = sbr.rel (%p155) target = $region24
      $region23: #{tpu_custom_call.1} parent=5 // pred_region
        // Predicated region
        $region25: #{tpu_custom_call.1} parent=23 // pred_check
          %p158 = pneg %p33
        $region26: #{tpu_custom_call.1} parent=23 // pred_check_branch
          %160 = sbr.rel (%p158) target = $region28
        $region27: #{tpu_custom_call.1} parent=23 // pred_region
          %s161 = smul.u32 128, %s13
          %p162 = scmp.lt.s32.totalorder %s161, 383
          %s163 = scalar_select %p162, %s161, 383
          %s164 = smul.addr %s163, 8
          %s165 = scalar_lea.vmem %s0, %s164
          %s166 = smul.u32 128, %s13
        $region28: #{tpu_custom_call.1} parent=23 // pred_fallthru
          _
        // Predicated region
        $region29: #{tpu_custom_call.1} parent=23 // pred_check
          %p167 = pneg %p59
        $region30: #{tpu_custom_call.1} parent=23 // pred_check_branch
          %169 = sbr.rel (%p167) target = $region32
        $region31: #{tpu_custom_call.1} parent=23 // pred_region
          %s170 = smul.u32 128, %s13
          %p171 = scmp.lt.s32.totalorder %s170, 383
          %s172 = scalar_select %p171, %s170, 383
          %s173 = smul.addr %s172, 8
          %s174 = scalar_lea.vmem %s1, %s173
          %s175 = smul.u32 128, %s13
        $region32: #{tpu_custom_call.1} parent=23 // pred_fallthru
          _
      $region24: #{tpu_custom_call.1} parent=5 // pred_fallthru
        _
      %p176 = scmp.le.s32.totalorder 1, %s13
      %p177 = scmp.lt.s32.totalorder %s13, 4
      %p178 = pnand %p176, %p177
      %p179 = pneg %p178
      // Predicated region
      $region33: #{tpu_custom_call.1} parent=5 // pred_check
        _
      $region34: #{tpu_custom_call.1} parent=5 // pred_check_branch
        %181 = sbr.rel (%p178) target = $region36
      $region35: #{tpu_custom_call.1} parent=5 // pred_region
        %s182 = ssub.s32 %s13, 1
        %s183 = smul.u32 128, %s18
        %p184 = scmp.lt.s32.totalorder %s183, 383
        %s185 = scalar_select %p184, %s183, 383
        %s186 = smul.addr %s185, 8
        %s187 = scalar_lea.vmem %s0, %s186
        %p188 = pneg %p39
        %p189 = pneg %p36
        %s190 = smul.u32 128, %s18
        %p191 = scmp.lt.s32.totalorder %s190, 383
        %s192 = scalar_select %p191, %s190, 383
        %s193 = smul.addr %s192, 8
        %s194 = scalar_lea.vmem %s1, %s193
        %p195 = pneg %p65
        %p196 = pneg %p62
        %p197 = pneg %p86
        %p198 = pneg %p83
        %p199 = pneg %p107
        %p200 = pneg %p104
        %p201 = pneg %p133
        %p202 = pneg %p130
        %s203 = sand.u32 %s120, 1
        %s204 = scalar_lea.sflag [#allocation3], %s203
        %s205 = sand.u32 %s120, 1
        %s206 = smul.addr %s205, 1024
        %s207 = scalar_lea.vmem [#allocation2], %s206
        %s208 = smul.u32 128, %s18
        %p209 = scmp.lt.s32.totalorder %s208, 383
        %s210 = scalar_select %p209, %s208, 383
        %s211 = smul.addr %s210, 8
        %s212 = scalar_lea.vmem %s0, %s211
        %s213 = smul.u32 128, %s18
        %s214 = smul.u32 128, %s18
        %p215 = scmp.lt.s32.totalorder %s214, 383
        %s216 = scalar_select %p215, %s214, 383
        %s217 = smul.addr %s216, 8
        %s218 = scalar_lea.vmem %s1, %s217
        %s219 = smul.u32 128, %s18
        %s220 = smul.u32 128, %s18
        %v221 = vld [vmem:[%s212] sm:$0xff]
        %v222 = vld [vmem:[%s212 + $0x8] sm:$0xff]
        %v223 = vld [vmem:[%s212 + $0x10] sm:$0xff]
        %v224 = vld [vmem:[%s212 + $0x18] sm:$0xff]
        %v225 = vld [vmem:[%s212 + $0x20] sm:$0xff]
        %v226 = vld [vmem:[%s212 + $0x28] sm:$0xff]
        %v227 = vld [vmem:[%s212 + $0x30] sm:$0xff]
        %v228 = vld [vmem:[%s212 + $0x38] sm:$0xff]
        %v229 = vld [vmem:[%s212 + $0x40] sm:$0xff]
        %v230 = vld [vmem:[%s212 + $0x48] sm:$0xff]
        %v231 = vld [vmem:[%s212 + $0x50] sm:$0xff]
        %v232 = vld [vmem:[%s212 + $0x58] sm:$0xff]
        %v233 = vld [vmem:[%s212 + $0x60] sm:$0xff]
        %v234 = vld [vmem:[%s212 + $0x68] sm:$0xff]
        %v235 = vld [vmem:[%s212 + $0x70] sm:$0xff]
        %v236 = vld [vmem:[%s212 + $0x78] sm:$0xff]
        %v237 = vld [vmem:[%s212 + $0x80] sm:$0xff]
        %v238 = vld [vmem:[%s212 + $0x88] sm:$0xff]
        %v239 = vld [vmem:[%s212 + $0x90] sm:$0xff]
        %v240 = vld [vmem:[%s212 + $0x98] sm:$0xff]
        %v241 = vld [vmem:[%s212 + $0xa0] sm:$0xff]
        %v242 = vld [vmem:[%s212 + $0xa8] sm:$0xff]
        %v243 = vld [vmem:[%s212 + $0xb0] sm:$0xff]
        %v244 = vld [vmem:[%s212 + $0xb8] sm:$0xff]
        %v245 = vld [vmem:[%s212 + $0xc0] sm:$0xff]
        %v246 = vld [vmem:[%s212 + $0xc8] sm:$0xff]
        %v247 = vld [vmem:[%s212 + $0xd0] sm:$0xff]
        %v248 = vld [vmem:[%s212 + $0xd8] sm:$0xff]
        %v249 = vld [vmem:[%s212 + $0xe0] sm:$0xff]
        %v250 = vld [vmem:[%s212 + $0xe8] sm:$0xff]
        %v251 = vld [vmem:[%s212 + $0xf0] sm:$0xff]
        %v252 = vld [vmem:[%s212 + $0xf8] sm:$0xff]
        %v253 = vld [vmem:[%s212 + $0x100] sm:$0xff]
        %v254 = vld [vmem:[%s212 + $0x108] sm:$0xff]
        %v255 = vld [vmem:[%s212 + $0x110] sm:$0xff]
        %v256 = vld [vmem:[%s212 + $0x118] sm:$0xff]
        %v257 = vld [vmem:[%s212 + $0x120] sm:$0xff]
        %v258 = vld [vmem:[%s212 + $0x128] sm:$0xff]
        %v259 = vld [vmem:[%s212 + $0x130] sm:$0xff]
        %v260 = vld [vmem:[%s212 + $0x138] sm:$0xff]
        %v261 = vld [vmem:[%s212 + $0x140] sm:$0xff]
        %v262 = vld [vmem:[%s212 + $0x148] sm:$0xff]
        %v263 = vld [vmem:[%s212 + $0x150] sm:$0xff]
        %v264 = vld [vmem:[%s212 + $0x158] sm:$0xff]
        %v265 = vld [vmem:[%s212 + $0x160] sm:$0xff]
        %v266 = vld [vmem:[%s212 + $0x168] sm:$0xff]
        %v267 = vld [vmem:[%s212 + $0x170] sm:$0xff]
        %v268 = vld [vmem:[%s212 + $0x178] sm:$0xff]
        %v269 = vld [vmem:[%s212 + $0x180] sm:$0xff]
        %v270 = vld [vmem:[%s212 + $0x188] sm:$0xff]
        %v271 = vld [vmem:[%s212 + $0x190] sm:$0xff]
        %v272 = vld [vmem:[%s212 + $0x198] sm:$0xff]
        %v273 = vld [vmem:[%s212 + $0x1a0] sm:$0xff]
        %v274 = vld [vmem:[%s212 + $0x1a8] sm:$0xff]
        %v275 = vld [vmem:[%s212 + $0x1b0] sm:$0xff]
        %v276 = vld [vmem:[%s212 + $0x1b8] sm:$0xff]
        %v277 = vld [vmem:[%s212 + $0x1c0] sm:$0xff]
        %v278 = vld [vmem:[%s212 + $0x1c8] sm:$0xff]
        %v279 = vld [vmem:[%s212 + $0x1d0] sm:$0xff]
        %v280 = vld [vmem:[%s212 + $0x1d8] sm:$0xff]
        %v281 = vld [vmem:[%s212 + $0x1e0] sm:$0xff]
        %v282 = vld [vmem:[%s212 + $0x1e8] sm:$0xff]
        %v283 = vld [vmem:[%s212 + $0x1f0] sm:$0xff]
        %v284 = vld [vmem:[%s212 + $0x1f8] sm:$0xff]
        %v285 = vld [vmem:[%s212 + $0x200] sm:$0xff]
        %v286 = vld [vmem:[%s212 + $0x208] sm:$0xff]
        %v287 = vld [vmem:[%s212 + $0x210] sm:$0xff]
        %v288 = vld [vmem:[%s212 + $0x218] sm:$0xff]
        %v289 = vld [vmem:[%s212 + $0x220] sm:$0xff]
        %v290 = vld [vmem:[%s212 + $0x228] sm:$0xff]
        %v291 = vld [vmem:[%s212 + $0x230] sm:$0xff]
        %v292 = vld [vmem:[%s212 + $0x238] sm:$0xff]
        %v293 = vld [vmem:[%s212 + $0x240] sm:$0xff]
        %v294 = vld [vmem:[%s212 + $0x248] sm:$0xff]
        %v295 = vld [vmem:[%s212 + $0x250] sm:$0xff]
        %v296 = vld [vmem:[%s212 + $0x258] sm:$0xff]
        %v297 = vld [vmem:[%s212 + $0x260] sm:$0xff]
        %v298 = vld [vmem:[%s212 + $0x268] sm:$0xff]
        %v299 = vld [vmem:[%s212 + $0x270] sm:$0xff]
        %v300 = vld [vmem:[%s212 + $0x278] sm:$0xff]
        %v301 = vld [vmem:[%s212 + $0x280] sm:$0xff]
        %v302 = vld [vmem:[%s212 + $0x288] sm:$0xff]
        %v303 = vld [vmem:[%s212 + $0x290] sm:$0xff]
        %v304 = vld [vmem:[%s212 + $0x298] sm:$0xff]
        %v305 = vld [vmem:[%s212 + $0x2a0] sm:$0xff]
        %v306 = vld [vmem:[%s212 + $0x2a8] sm:$0xff]
        %v307 = vld [vmem:[%s212 + $0x2b0] sm:$0xff]
        %v308 = vld [vmem:[%s212 + $0x2b8] sm:$0xff]
        %v309 = vld [vmem:[%s212 + $0x2c0] sm:$0xff]
        %v310 = vld [vmem:[%s212 + $0x2c8] sm:$0xff]
        %v311 = vld [vmem:[%s212 + $0x2d0] sm:$0xff]
        %v312 = vld [vmem:[%s212 + $0x2d8] sm:$0xff]
        %v313 = vld [vmem:[%s212 + $0x2e0] sm:$0xff]
        %v314 = vld [vmem:[%s212 + $0x2e8] sm:$0xff]
        %v315 = vld [vmem:[%s212 + $0x2f0] sm:$0xff]
        %v316 = vld [vmem:[%s212 + $0x2f8] sm:$0xff]
        %v317 = vld [vmem:[%s212 + $0x300] sm:$0xff]
        %v318 = vld [vmem:[%s212 + $0x308] sm:$0xff]
        %v319 = vld [vmem:[%s212 + $0x310] sm:$0xff]
        %v320 = vld [vmem:[%s212 + $0x318] sm:$0xff]
        %v321 = vld [vmem:[%s212 + $0x320] sm:$0xff]
        %v322 = vld [vmem:[%s212 + $0x328] sm:$0xff]
        %v323 = vld [vmem:[%s212 + $0x330] sm:$0xff]
        %v324 = vld [vmem:[%s212 + $0x338] sm:$0xff]
        %v325 = vld [vmem:[%s212 + $0x340] sm:$0xff]
        %v326 = vld [vmem:[%s212 + $0x348] sm:$0xff]
        %v327 = vld [vmem:[%s212 + $0x350] sm:$0xff]
        %v328 = vld [vmem:[%s212 + $0x358] sm:$0xff]
        %v329 = vld [vmem:[%s212 + $0x360] sm:$0xff]
        %v330 = vld [vmem:[%s212 + $0x368] sm:$0xff]
        %v331 = vld [vmem:[%s212 + $0x370] sm:$0xff]
        %v332 = vld [vmem:[%s212 + $0x378] sm:$0xff]
        %v333 = vld [vmem:[%s212 + $0x380] sm:$0xff]
        %v334 = vld [vmem:[%s212 + $0x388] sm:$0xff]
        %v335 = vld [vmem:[%s212 + $0x390] sm:$0xff]
        %v336 = vld [vmem:[%s212 + $0x398] sm:$0xff]
        %v337 = vld [vmem:[%s212 + $0x3a0] sm:$0xff]
        %v338 = vld [vmem:[%s212 + $0x3a8] sm:$0xff]
        %v339 = vld [vmem:[%s212 + $0x3b0] sm:$0xff]
        %v340 = vld [vmem:[%s212 + $0x3b8] sm:$0xff]
        %v341 = vld [vmem:[%s212 + $0x3c0] sm:$0xff]
        %v342 = vld [vmem:[%s212 + $0x3c8] sm:$0xff]
        %v343 = vld [vmem:[%s212 + $0x3d0] sm:$0xff]
        %v344 = vld [vmem:[%s212 + $0x3d8] sm:$0xff]
        %v345 = vld [vmem:[%s212 + $0x3e0] sm:$0xff]
        %v346 = vld [vmem:[%s212 + $0x3e8] sm:$0xff]
        %v347 = vld [vmem:[%s212 + $0x3f0] sm:$0xff]
        %v348 = vld [vmem:[%s212 + $0x3f8] sm:$0xff]
        %v349 = vld [vmem:[%s218] sm:$0xff]
        %v350 = vld [vmem:[%s218 + $0x8] sm:$0xff]
        %v351 = vld [vmem:[%s218 + $0x10] sm:$0xff]
        %v352 = vld [vmem:[%s218 + $0x18] sm:$0xff]
        %v353 = vld [vmem:[%s218 + $0x20] sm:$0xff]
        %v354 = vld [vmem:[%s218 + $0x28] sm:$0xff]
        %v355 = vld [vmem:[%s218 + $0x30] sm:$0xff]
        %v356 = vld [vmem:[%s218 + $0x38] sm:$0xff]
        %v357 = vld [vmem:[%s218 + $0x40] sm:$0xff]
        %v358 = vld [vmem:[%s218 + $0x48] sm:$0xff]
        %v359 = vld [vmem:[%s218 + $0x50] sm:$0xff]
        %v360 = vld [vmem:[%s218 + $0x58] sm:$0xff]
        %v361 = vld [vmem:[%s218 + $0x60] sm:$0xff]
        %v362 = vld [vmem:[%s218 + $0x68] sm:$0xff]
        %v363 = vld [vmem:[%s218 + $0x70] sm:$0xff]
        %v364 = vld [vmem:[%s218 + $0x78] sm:$0xff]
        %v365 = vld [vmem:[%s218 + $0x80] sm:$0xff]
        %v366 = vld [vmem:[%s218 + $0x88] sm:$0xff]
        %v367 = vld [vmem:[%s218 + $0x90] sm:$0xff]
        %v368 = vld [vmem:[%s218 + $0x98] sm:$0xff]
        %v369 = vld [vmem:[%s218 + $0xa0] sm:$0xff]
        %v370 = vld [vmem:[%s218 + $0xa8] sm:$0xff]
        %v371 = vld [vmem:[%s218 + $0xb0] sm:$0xff]
        %v372 = vld [vmem:[%s218 + $0xb8] sm:$0xff]
        %v373 = vld [vmem:[%s218 + $0xc0] sm:$0xff]
        %v374 = vld [vmem:[%s218 + $0xc8] sm:$0xff]
        %v375 = vld [vmem:[%s218 + $0xd0] sm:$0xff]
        %v376 = vld [vmem:[%s218 + $0xd8] sm:$0xff]
        %v377 = vld [vmem:[%s218 + $0xe0] sm:$0xff]
        %v378 = vld [vmem:[%s218 + $0xe8] sm:$0xff]
        %v379 = vld [vmem:[%s218 + $0xf0] sm:$0xff]
        %v380 = vld [vmem:[%s218 + $0xf8] sm:$0xff]
        %v381 = vld [vmem:[%s218 + $0x100] sm:$0xff]
        %v382 = vld [vmem:[%s218 + $0x108] sm:$0xff]
        %v383 = vld [vmem:[%s218 + $0x110] sm:$0xff]
        %v384 = vld [vmem:[%s218 + $0x118] sm:$0xff]
        %v385 = vld [vmem:[%s218 + $0x120] sm:$0xff]
        %v386 = vld [vmem:[%s218 + $0x128] sm:$0xff]
        %v387 = vld [vmem:[%s218 + $0x130] sm:$0xff]
        %v388 = vld [vmem:[%s218 + $0x138] sm:$0xff]
        %v389 = vld [vmem:[%s218 + $0x140] sm:$0xff]
        %v390 = vld [vmem:[%s218 + $0x148] sm:$0xff]
        %v391 = vld [vmem:[%s218 + $0x150] sm:$0xff]
        %v392 = vld [vmem:[%s218 + $0x158] sm:$0xff]
        %v393 = vld [vmem:[%s218 + $0x160] sm:$0xff]
        %v394 = vld [vmem:[%s218 + $0x168] sm:$0xff]
        %v395 = vld [vmem:[%s218 + $0x170] sm:$0xff]
        %v396 = vld [vmem:[%s218 + $0x178] sm:$0xff]
        %v397 = vld [vmem:[%s218 + $0x180] sm:$0xff]
        %v398 = vld [vmem:[%s218 + $0x188] sm:$0xff]
        %v399 = vld [vmem:[%s218 + $0x190] sm:$0xff]
        %v400 = vld [vmem:[%s218 + $0x198] sm:$0xff]
        %v401 = vld [vmem:[%s218 + $0x1a0] sm:$0xff]
        %v402 = vld [vmem:[%s218 + $0x1a8] sm:$0xff]
        %v403 = vld [vmem:[%s218 + $0x1b0] sm:$0xff]
        %v404 = vld [vmem:[%s218 + $0x1b8] sm:$0xff]
        %v405 = vld [vmem:[%s218 + $0x1c0] sm:$0xff]
        %v406 = vld [vmem:[%s218 + $0x1c8] sm:$0xff]
        %v407 = vld [vmem:[%s218 + $0x1d0] sm:$0xff]
        %v408 = vld [vmem:[%s218 + $0x1d8] sm:$0xff]
        %v409 = vld [vmem:[%s218 + $0x1e0] sm:$0xff]
        %v410 = vld [vmem:[%s218 + $0x1e8] sm:$0xff]
        %v411 = vld [vmem:[%s218 + $0x1f0] sm:$0xff]
        %v412 = vld [vmem:[%s218 + $0x1f8] sm:$0xff]
        %v413 = vld [vmem:[%s218 + $0x200] sm:$0xff]
        %v414 = vld [vmem:[%s218 + $0x208] sm:$0xff]
        %v415 = vld [vmem:[%s218 + $0x210] sm:$0xff]
        %v416 = vld [vmem:[%s218 + $0x218] sm:$0xff]
        %v417 = vld [vmem:[%s218 + $0x220] sm:$0xff]
        %v418 = vld [vmem:[%s218 + $0x228] sm:$0xff]
        %v419 = vld [vmem:[%s218 + $0x230] sm:$0xff]
        %v420 = vld [vmem:[%s218 + $0x238] sm:$0xff]
        %v421 = vld [vmem:[%s218 + $0x240] sm:$0xff]
        %v422 = vld [vmem:[%s218 + $0x248] sm:$0xff]
        %v423 = vld [vmem:[%s218 + $0x250] sm:$0xff]
        %v424 = vld [vmem:[%s218 + $0x258] sm:$0xff]
        %v425 = vld [vmem:[%s218 + $0x260] sm:$0xff]
        %v426 = vld [vmem:[%s218 + $0x268] sm:$0xff]
        %v427 = vld [vmem:[%s218 + $0x270] sm:$0xff]
        %v428 = vld [vmem:[%s218 + $0x278] sm:$0xff]
        %v429 = vld [vmem:[%s218 + $0x280] sm:$0xff]
        %v430 = vld [vmem:[%s218 + $0x288] sm:$0xff]
        %v431 = vld [vmem:[%s218 + $0x290] sm:$0xff]
        %v432 = vld [vmem:[%s218 + $0x298] sm:$0xff]
        %v433 = vld [vmem:[%s218 + $0x2a0] sm:$0xff]
        %v434 = vld [vmem:[%s218 + $0x2a8] sm:$0xff]
        %v435 = vld [vmem:[%s218 + $0x2b0] sm:$0xff]
        %v436 = vld [vmem:[%s218 + $0x2b8] sm:$0xff]
        %v437 = vld [vmem:[%s218 + $0x2c0] sm:$0xff]
        %v438 = vld [vmem:[%s218 + $0x2c8] sm:$0xff]
        %v439 = vld [vmem:[%s218 + $0x2d0] sm:$0xff]
        %v440 = vld [vmem:[%s218 + $0x2d8] sm:$0xff]
        %v441 = vld [vmem:[%s218 + $0x2e0] sm:$0xff]
        %v442 = vld [vmem:[%s218 + $0x2e8] sm:$0xff]
        %v443 = vld [vmem:[%s218 + $0x2f0] sm:$0xff]
        %v444 = vld [vmem:[%s218 + $0x2f8] sm:$0xff]
        %v445 = vld [vmem:[%s218 + $0x300] sm:$0xff]
        %v446 = vld [vmem:[%s218 + $0x308] sm:$0xff]
        %v447 = vld [vmem:[%s218 + $0x310] sm:$0xff]
        %v448 = vld [vmem:[%s218 + $0x318] sm:$0xff]
        %v449 = vld [vmem:[%s218 + $0x320] sm:$0xff]
        %v450 = vld [vmem:[%s218 + $0x328] sm:$0xff]
        %v451 = vld [vmem:[%s218 + $0x330] sm:$0xff]
        %v452 = vld [vmem:[%s218 + $0x338] sm:$0xff]
        %v453 = vld [vmem:[%s218 + $0x340] sm:$0xff]
        %v454 = vld [vmem:[%s218 + $0x348] sm:$0xff]
        %v455 = vld [vmem:[%s218 + $0x350] sm:$0xff]
        %v456 = vld [vmem:[%s218 + $0x358] sm:$0xff]
        %v457 = vld [vmem:[%s218 + $0x360] sm:$0xff]
        %v458 = vld [vmem:[%s218 + $0x368] sm:$0xff]
        %v459 = vld [vmem:[%s218 + $0x370] sm:$0xff]
        %v460 = vld [vmem:[%s218 + $0x378] sm:$0xff]
        %v461 = vld [vmem:[%s218 + $0x380] sm:$0xff]
        %v462 = vld [vmem:[%s218 + $0x388] sm:$0xff]
        %v463 = vld [vmem:[%s218 + $0x390] sm:$0xff]
        %v464 = vld [vmem:[%s218 + $0x398] sm:$0xff]
        %v465 = vld [vmem:[%s218 + $0x3a0] sm:$0xff]
        %v466 = vld [vmem:[%s218 + $0x3a8] sm:$0xff]
        %v467 = vld [vmem:[%s218 + $0x3b0] sm:$0xff]
        %v468 = vld [vmem:[%s218 + $0x3b8] sm:$0xff]
        %v469 = vld [vmem:[%s218 + $0x3c0] sm:$0xff]
        %v470 = vld [vmem:[%s218 + $0x3c8] sm:$0xff]
        %v471 = vld [vmem:[%s218 + $0x3d0] sm:$0xff]
        %v472 = vld [vmem:[%s218 + $0x3d8] sm:$0xff]
        %v473 = vld [vmem:[%s218 + $0x3e0] sm:$0xff]
        %v474 = vld [vmem:[%s218 + $0x3e8] sm:$0xff]
        %v475 = vld [vmem:[%s218 + $0x3f0] sm:$0xff]
        %v476 = vld [vmem:[%s218 + $0x3f8] sm:$0xff]
        %v477 = vld [vmem:[%s2] sm:$0x1]
        %479 = vset.pattern.permute.xlu0 0
        %480 = vperm.xlu0 %479, %v349
        %v481 = vpop.permute.xlu0 %480
        %484 = vset.pattern.permute.xlu0 0
        %485 = vperm.xlu0 %484, %v350
        %v486 = vpop.permute.xlu0 %485
        %489 = vset.pattern.permute.xlu0 0
        %490 = vperm.xlu0 %489, %v351
        %v491 = vpop.permute.xlu0 %490
        %494 = vset.pattern.permute.xlu0 0
        %495 = vperm.xlu0 %494, %v352
        %v496 = vpop.permute.xlu0 %495
        %499 = vset.pattern.permute.xlu0 0
        %500 = vperm.xlu0 %499, %v353
        %v501 = vpop.permute.xlu0 %500
        %504 = vset.pattern.permute.xlu0 0
        %505 = vperm.xlu0 %504, %v354
        %v506 = vpop.permute.xlu0 %505
        %509 = vset.pattern.permute.xlu0 0
        %510 = vperm.xlu0 %509, %v355
        %v511 = vpop.permute.xlu0 %510
        %514 = vset.pattern.permute.xlu0 0
        %515 = vperm.xlu0 %514, %v356
        %v516 = vpop.permute.xlu0 %515
        %519 = vset.pattern.permute.xlu0 0
        %520 = vperm.xlu0 %519, %v357
        %v521 = vpop.permute.xlu0 %520
        %524 = vset.pattern.permute.xlu0 0
        %525 = vperm.xlu0 %524, %v358
        %v526 = vpop.permute.xlu0 %525
        %529 = vset.pattern.permute.xlu0 0
        %530 = vperm.xlu0 %529, %v359
        %v531 = vpop.permute.xlu0 %530
        %534 = vset.pattern.permute.xlu0 0
        %535 = vperm.xlu0 %534, %v360
        %v536 = vpop.permute.xlu0 %535
        %539 = vset.pattern.permute.xlu0 0
        %540 = vperm.xlu0 %539, %v361
        %v541 = vpop.permute.xlu0 %540
        %544 = vset.pattern.permute.xlu0 0
        %545 = vperm.xlu0 %544, %v362
        %v546 = vpop.permute.xlu0 %545
        %549 = vset.pattern.permute.xlu0 0
        %550 = vperm.xlu0 %549, %v363
        %v551 = vpop.permute.xlu0 %550
        %554 = vset.pattern.permute.xlu0 0
        %555 = vperm.xlu0 %554, %v364
        %v556 = vpop.permute.xlu0 %555
        %559 = vset.pattern.permute.xlu0 0
        %560 = vperm.xlu0 %559, %v365
        %v561 = vpop.permute.xlu0 %560
        %564 = vset.pattern.permute.xlu0 0
        %565 = vperm.xlu0 %564, %v366
        %v566 = vpop.permute.xlu0 %565
        %569 = vset.pattern.permute.xlu0 0
        %570 = vperm.xlu0 %569, %v367
        %v571 = vpop.permute.xlu0 %570
        %574 = vset.pattern.permute.xlu0 0
        %575 = vperm.xlu0 %574, %v368
        %v576 = vpop.permute.xlu0 %575
        %579 = vset.pattern.permute.xlu0 0
        %580 = vperm.xlu0 %579, %v369
        %v581 = vpop.permute.xlu0 %580
        %584 = vset.pattern.permute.xlu0 0
        %585 = vperm.xlu0 %584, %v370
        %v586 = vpop.permute.xlu0 %585
        %589 = vset.pattern.permute.xlu0 0
        %590 = vperm.xlu0 %589, %v371
        %v591 = vpop.permute.xlu0 %590
        %594 = vset.pattern.permute.xlu0 0
        %595 = vperm.xlu0 %594, %v372
        %v596 = vpop.permute.xlu0 %595
        %599 = vset.pattern.permute.xlu0 0
        %600 = vperm.xlu0 %599, %v373
        %v601 = vpop.permute.xlu0 %600
        %604 = vset.pattern.permute.xlu0 0
        %605 = vperm.xlu0 %604, %v374
        %v606 = vpop.permute.xlu0 %605
        %609 = vset.pattern.permute.xlu0 0
        %610 = vperm.xlu0 %609, %v375
        %v611 = vpop.permute.xlu0 %610
        %614 = vset.pattern.permute.xlu0 0
        %615 = vperm.xlu0 %614, %v376
        %v616 = vpop.permute.xlu0 %615
        %619 = vset.pattern.permute.xlu0 0
        %620 = vperm.xlu0 %619, %v377
        %v621 = vpop.permute.xlu0 %620
        %624 = vset.pattern.permute.xlu0 0
        %625 = vperm.xlu0 %624, %v378
        %v626 = vpop.permute.xlu0 %625
        %629 = vset.pattern.permute.xlu0 0
        %630 = vperm.xlu0 %629, %v379
        %v631 = vpop.permute.xlu0 %630
        %634 = vset.pattern.permute.xlu0 0
        %635 = vperm.xlu0 %634, %v380
        %v636 = vpop.permute.xlu0 %635
        %639 = vset.pattern.permute.xlu0 0
        %640 = vperm.xlu0 %639, %v381
        %v641 = vpop.permute.xlu0 %640
        %644 = vset.pattern.permute.xlu0 0
        %645 = vperm.xlu0 %644, %v382
        %v646 = vpop.permute.xlu0 %645
        %649 = vset.pattern.permute.xlu0 0
        %650 = vperm.xlu0 %649, %v383
        %v651 = vpop.permute.xlu0 %650
        %654 = vset.pattern.permute.xlu0 0
        %655 = vperm.xlu0 %654, %v384
        %v656 = vpop.permute.xlu0 %655
        %659 = vset.pattern.permute.xlu0 0
        %660 = vperm.xlu0 %659, %v385
        %v661 = vpop.permute.xlu0 %660
        %664 = vset.pattern.permute.xlu0 0
        %665 = vperm.xlu0 %664, %v386
        %v666 = vpop.permute.xlu0 %665
        %669 = vset.pattern.permute.xlu0 0
        %670 = vperm.xlu0 %669, %v387
        %v671 = vpop.permute.xlu0 %670
        %674 = vset.pattern.permute.xlu0 0
        %675 = vperm.xlu0 %674, %v388
        %v676 = vpop.permute.xlu0 %675
        %679 = vset.pattern.permute.xlu0 0
        %680 = vperm.xlu0 %679, %v389
        %v681 = vpop.permute.xlu0 %680
        %684 = vset.pattern.permute.xlu0 0
        %685 = vperm.xlu0 %684, %v390
        %v686 = vpop.permute.xlu0 %685
        %689 = vset.pattern.permute.xlu0 0
        %690 = vperm.xlu0 %689, %v391
        %v691 = vpop.permute.xlu0 %690
        %694 = vset.pattern.permute.xlu0 0
        %695 = vperm.xlu0 %694, %v392
        %v696 = vpop.permute.xlu0 %695
        %699 = vset.pattern.permute.xlu0 0
        %700 = vperm.xlu0 %699, %v393
        %v701 = vpop.permute.xlu0 %700
        %704 = vset.pattern.permute.xlu0 0
        %705 = vperm.xlu0 %704, %v394
        %v706 = vpop.permute.xlu0 %705
        %709 = vset.pattern.permute.xlu0 0
        %710 = vperm.xlu0 %709, %v395
        %v711 = vpop.permute.xlu0 %710
        %714 = vset.pattern.permute.xlu0 0
        %715 = vperm.xlu0 %714, %v396
        %v716 = vpop.permute.xlu0 %715
        %719 = vset.pattern.permute.xlu0 0
        %720 = vperm.xlu0 %719, %v397
        %v721 = vpop.permute.xlu0 %720
        %724 = vset.pattern.permute.xlu0 0
        %725 = vperm.xlu0 %724, %v398
        %v726 = vpop.permute.xlu0 %725
        %729 = vset.pattern.permute.xlu0 0
        %730 = vperm.xlu0 %729, %v399
        %v731 = vpop.permute.xlu0 %730
        %734 = vset.pattern.permute.xlu0 0
        %735 = vperm.xlu0 %734, %v400
        %v736 = vpop.permute.xlu0 %735
        %739 = vset.pattern.permute.xlu0 0
        %740 = vperm.xlu0 %739, %v401
        %v741 = vpop.permute.xlu0 %740
        %744 = vset.pattern.permute.xlu0 0
        %745 = vperm.xlu0 %744, %v402
        %v746 = vpop.permute.xlu0 %745
        %749 = vset.pattern.permute.xlu0 0
        %750 = vperm.xlu0 %749, %v403
        %v751 = vpop.permute.xlu0 %750
        %754 = vset.pattern.permute.xlu0 0
        %755 = vperm.xlu0 %754, %v404
        %v756 = vpop.permute.xlu0 %755
        %759 = vset.pattern.permute.xlu0 0
        %760 = vperm.xlu0 %759, %v405
        %v761 = vpop.permute.xlu0 %760
        %764 = vset.pattern.permute.xlu0 0
        %765 = vperm.xlu0 %764, %v406
        %v766 = vpop.permute.xlu0 %765
        %769 = vset.pattern.permute.xlu0 0
        %770 = vperm.xlu0 %769, %v407
        %v771 = vpop.permute.xlu0 %770
        %774 = vset.pattern.permute.xlu0 0
        %775 = vperm.xlu0 %774, %v408
        %v776 = vpop.permute.xlu0 %775
        %779 = vset.pattern.permute.xlu0 0
        %780 = vperm.xlu0 %779, %v409
        %v781 = vpop.permute.xlu0 %780
        %784 = vset.pattern.permute.xlu0 0
        %785 = vperm.xlu0 %784, %v410
        %v786 = vpop.permute.xlu0 %785
        %789 = vset.pattern.permute.xlu0 0
        %790 = vperm.xlu0 %789, %v411
        %v791 = vpop.permute.xlu0 %790
        %794 = vset.pattern.permute.xlu0 0
        %795 = vperm.xlu0 %794, %v412
        %v796 = vpop.permute.xlu0 %795
        %799 = vset.pattern.permute.xlu0 0
        %800 = vperm.xlu0 %799, %v413
        %v801 = vpop.permute.xlu0 %800
        %804 = vset.pattern.permute.xlu0 0
        %805 = vperm.xlu0 %804, %v414
        %v806 = vpop.permute.xlu0 %805
        %809 = vset.pattern.permute.xlu0 0
        %810 = vperm.xlu0 %809, %v415
        %v811 = vpop.permute.xlu0 %810
        %814 = vset.pattern.permute.xlu0 0
        %815 = vperm.xlu0 %814, %v416
        %v816 = vpop.permute.xlu0 %815
        %819 = vset.pattern.permute.xlu0 0
        %820 = vperm.xlu0 %819, %v417
        %v821 = vpop.permute.xlu0 %820
        %824 = vset.pattern.permute.xlu0 0
        %825 = vperm.xlu0 %824, %v418
        %v826 = vpop.permute.xlu0 %825
        %829 = vset.pattern.permute.xlu0 0
        %830 = vperm.xlu0 %829, %v419
        %v831 = vpop.permute.xlu0 %830
        %834 = vset.pattern.permute.xlu0 0
        %835 = vperm.xlu0 %834, %v420
        %v836 = vpop.permute.xlu0 %835
        %839 = vset.pattern.permute.xlu0 0
        %840 = vperm.xlu0 %839, %v421
        %v841 = vpop.permute.xlu0 %840
        %844 = vset.pattern.permute.xlu0 0
        %845 = vperm.xlu0 %844, %v422
        %v846 = vpop.permute.xlu0 %845
        %849 = vset.pattern.permute.xlu0 0
        %850 = vperm.xlu0 %849, %v423
        %v851 = vpop.permute.xlu0 %850
        %854 = vset.pattern.permute.xlu0 0
        %855 = vperm.xlu0 %854, %v424
        %v856 = vpop.permute.xlu0 %855
        %859 = vset.pattern.permute.xlu0 0
        %860 = vperm.xlu0 %859, %v425
        %v861 = vpop.permute.xlu0 %860
        %864 = vset.pattern.permute.xlu0 0
        %865 = vperm.xlu0 %864, %v426
        %v866 = vpop.permute.xlu0 %865
        %869 = vset.pattern.permute.xlu0 0
        %870 = vperm.xlu0 %869, %v427
        %v871 = vpop.permute.xlu0 %870
        %874 = vset.pattern.permute.xlu0 0
        %875 = vperm.xlu0 %874, %v428
        %v876 = vpop.permute.xlu0 %875
        %879 = vset.pattern.permute.xlu0 0
        %880 = vperm.xlu0 %879, %v429
        %v881 = vpop.permute.xlu0 %880
        %884 = vset.pattern.permute.xlu0 0
        %885 = vperm.xlu0 %884, %v430
        %v886 = vpop.permute.xlu0 %885
        %889 = vset.pattern.permute.xlu0 0
        %890 = vperm.xlu0 %889, %v431
        %v891 = vpop.permute.xlu0 %890
        %894 = vset.pattern.permute.xlu0 0
        %895 = vperm.xlu0 %894, %v432
        %v896 = vpop.permute.xlu0 %895
        %899 = vset.pattern.permute.xlu0 0
        %900 = vperm.xlu0 %899, %v433
        %v901 = vpop.permute.xlu0 %900
        %904 = vset.pattern.permute.xlu0 0
        %905 = vperm.xlu0 %904, %v434
        %v906 = vpop.permute.xlu0 %905
        %909 = vset.pattern.permute.xlu0 0
        %910 = vperm.xlu0 %909, %v435
        %v911 = vpop.permute.xlu0 %910
        %914 = vset.pattern.permute.xlu0 0
        %915 = vperm.xlu0 %914, %v436
        %v916 = vpop.permute.xlu0 %915
        %919 = vset.pattern.permute.xlu0 0
        %920 = vperm.xlu0 %919, %v437
        %v921 = vpop.permute.xlu0 %920
        %924 = vset.pattern.permute.xlu0 0
        %925 = vperm.xlu0 %924, %v438
        %v926 = vpop.permute.xlu0 %925
        %929 = vset.pattern.permute.xlu0 0
        %930 = vperm.xlu0 %929, %v439
        %v931 = vpop.permute.xlu0 %930
        %934 = vset.pattern.permute.xlu0 0
        %935 = vperm.xlu0 %934, %v440
        %v936 = vpop.permute.xlu0 %935
        %939 = vset.pattern.permute.xlu0 0
        %940 = vperm.xlu0 %939, %v441
        %v941 = vpop.permute.xlu0 %940
        %944 = vset.pattern.permute.xlu0 0
        %945 = vperm.xlu0 %944, %v442
        %v946 = vpop.permute.xlu0 %945
        %949 = vset.pattern.permute.xlu0 0
        %950 = vperm.xlu0 %949, %v443
        %v951 = vpop.permute.xlu0 %950
        %954 = vset.pattern.permute.xlu0 0
        %955 = vperm.xlu0 %954, %v444
        %v956 = vpop.permute.xlu0 %955
        %959 = vset.pattern.permute.xlu0 0
        %960 = vperm.xlu0 %959, %v445
        %v961 = vpop.permute.xlu0 %960
        %964 = vset.pattern.permute.xlu0 0
        %965 = vperm.xlu0 %964, %v446
        %v966 = vpop.permute.xlu0 %965
        %969 = vset.pattern.permute.xlu0 0
        %970 = vperm.xlu0 %969, %v447
        %v971 = vpop.permute.xlu0 %970
        %974 = vset.pattern.permute.xlu0 0
        %975 = vperm.xlu0 %974, %v448
        %v976 = vpop.permute.xlu0 %975
        %979 = vset.pattern.permute.xlu0 0
        %980 = vperm.xlu0 %979, %v449
        %v981 = vpop.permute.xlu0 %980
        %984 = vset.pattern.permute.xlu0 0
        %985 = vperm.xlu0 %984, %v450
        %v986 = vpop.permute.xlu0 %985
        %989 = vset.pattern.permute.xlu0 0
        %990 = vperm.xlu0 %989, %v451
        %v991 = vpop.permute.xlu0 %990
        %994 = vset.pattern.permute.xlu0 0
        %995 = vperm.xlu0 %994, %v452
        %v996 = vpop.permute.xlu0 %995
        %999 = vset.pattern.permute.xlu0 0
        %1000 = vperm.xlu0 %999, %v453
        %v1001 = vpop.permute.xlu0 %1000
        %1004 = vset.pattern.permute.xlu0 0
        %1005 = vperm.xlu0 %1004, %v454
        %v1006 = vpop.permute.xlu0 %1005
        %1009 = vset.pattern.permute.xlu0 0
        %1010 = vperm.xlu0 %1009, %v455
        %v1011 = vpop.permute.xlu0 %1010
        %1014 = vset.pattern.permute.xlu0 0
        %1015 = vperm.xlu0 %1014, %v456
        %v1016 = vpop.permute.xlu0 %1015
        %1019 = vset.pattern.permute.xlu0 0
        %1020 = vperm.xlu0 %1019, %v457
        %v1021 = vpop.permute.xlu0 %1020
        %1024 = vset.pattern.permute.xlu0 0
        %1025 = vperm.xlu0 %1024, %v458
        %v1026 = vpop.permute.xlu0 %1025
        %1029 = vset.pattern.permute.xlu0 0
        %1030 = vperm.xlu0 %1029, %v459
        %v1031 = vpop.permute.xlu0 %1030
        %1034 = vset.pattern.permute.xlu0 0
        %1035 = vperm.xlu0 %1034, %v460
        %v1036 = vpop.permute.xlu0 %1035
        %1039 = vset.pattern.permute.xlu0 0
        %1040 = vperm.xlu0 %1039, %v461
        %v1041 = vpop.permute.xlu0 %1040
        %1044 = vset.pattern.permute.xlu0 0
        %1045 = vperm.xlu0 %1044, %v462
        %v1046 = vpop.permute.xlu0 %1045
        %1049 = vset.pattern.permute.xlu0 0
        %1050 = vperm.xlu0 %1049, %v463
        %v1051 = vpop.permute.xlu0 %1050
        %1054 = vset.pattern.permute.xlu0 0
        %1055 = vperm.xlu0 %1054, %v464
        %v1056 = vpop.permute.xlu0 %1055
        %1059 = vset.pattern.permute.xlu0 0
        %1060 = vperm.xlu0 %1059, %v465
        %v1061 = vpop.permute.xlu0 %1060
        %1064 = vset.pattern.permute.xlu0 0
        %1065 = vperm.xlu0 %1064, %v466
        %v1066 = vpop.permute.xlu0 %1065
        %1069 = vset.pattern.permute.xlu0 0
        %1070 = vperm.xlu0 %1069, %v467
        %v1071 = vpop.permute.xlu0 %1070
        %1074 = vset.pattern.permute.xlu0 0
        %1075 = vperm.xlu0 %1074, %v468
        %v1076 = vpop.permute.xlu0 %1075
        %1079 = vset.pattern.permute.xlu0 0
        %1080 = vperm.xlu0 %1079, %v469
        %v1081 = vpop.permute.xlu0 %1080
        %1084 = vset.pattern.permute.xlu0 0
        %1085 = vperm.xlu0 %1084, %v470
        %v1086 = vpop.permute.xlu0 %1085
        %1089 = vset.pattern.permute.xlu0 0
        %1090 = vperm.xlu0 %1089, %v471
        %v1091 = vpop.permute.xlu0 %1090
        %1094 = vset.pattern.permute.xlu0 0
        %1095 = vperm.xlu0 %1094, %v472
        %v1096 = vpop.permute.xlu0 %1095
        %1099 = vset.pattern.permute.xlu0 0
        %1100 = vperm.xlu0 %1099, %v473
        %v1101 = vpop.permute.xlu0 %1100
        %1104 = vset.pattern.permute.xlu0 0
        %1105 = vperm.xlu0 %1104, %v474
        %v1106 = vpop.permute.xlu0 %1105
        %1109 = vset.pattern.permute.xlu0 0
        %1110 = vperm.xlu0 %1109, %v475
        %v1111 = vpop.permute.xlu0 %1110
        %1114 = vset.pattern.permute.xlu0 0
        %1115 = vperm.xlu0 %1114, %v476
        %v1116 = vpop.permute.xlu0 %1115
        %v1119 = vlaneseq
        %v1120 = vshrl.u32 %v1119, 7
        %v1121 = vsub.s32 0, %v1120
        %v1122 = vrot.slane %v477, %v1121
        %v1124 = vsub.f32 %v481, %v1122
        %v1125 = vsub.f32 %v486, %v1122
        %v1126 = vsub.f32 %v491, %v1122
        %v1127 = vsub.f32 %v496, %v1122
        %v1128 = vsub.f32 %v501, %v1122
        %v1129 = vsub.f32 %v506, %v1122
        %v1130 = vsub.f32 %v511, %v1122
        %v1131 = vsub.f32 %v516, %v1122
        %v1132 = vsub.f32 %v521, %v1122
        %v1133 = vsub.f32 %v526, %v1122
        %v1134 = vsub.f32 %v531, %v1122
        %v1135 = vsub.f32 %v536, %v1122
        %v1136 = vsub.f32 %v541, %v1122
        %v1137 = vsub.f32 %v546, %v1122
        %v1138 = vsub.f32 %v551, %v1122
        %v1139 = vsub.f32 %v556, %v1122
        %v1140 = vsub.f32 %v561, %v1122
        %v1141 = vsub.f32 %v566, %v1122
        %v1142 = vsub.f32 %v571, %v1122
        %v1143 = vsub.f32 %v576, %v1122
        %v1144 = vsub.f32 %v581, %v1122
        %v1145 = vsub.f32 %v586, %v1122
        %v1146 = vsub.f32 %v591, %v1122
        %v1147 = vsub.f32 %v596, %v1122
        %v1148 = vsub.f32 %v601, %v1122
        %v1149 = vsub.f32 %v606, %v1122
        %v1150 = vsub.f32 %v611, %v1122
        %v1151 = vsub.f32 %v616, %v1122
        %v1152 = vsub.f32 %v621, %v1122
        %v1153 = vsub.f32 %v626, %v1122
        %v1154 = vsub.f32 %v631, %v1122
        %v1155 = vsub.f32 %v636, %v1122
        %v1156 = vsub.f32 %v641, %v1122
        %v1157 = vsub.f32 %v646, %v1122
        %v1158 = vsub.f32 %v651, %v1122
        %v1159 = vsub.f32 %v656, %v1122
        %v1160 = vsub.f32 %v661, %v1122
        %v1161 = vsub.f32 %v666, %v1122
        %v1162 = vsub.f32 %v671, %v1122
        %v1163 = vsub.f32 %v676, %v1122
        %v1164 = vsub.f32 %v681, %v1122
        %v1165 = vsub.f32 %v686, %v1122
        %v1166 = vsub.f32 %v691, %v1122
        %v1167 = vsub.f32 %v696, %v1122
        %v1168 = vsub.f32 %v701, %v1122
        %v1169 = vsub.f32 %v706, %v1122
        %v1170 = vsub.f32 %v711, %v1122
        %v1171 = vsub.f32 %v716, %v1122
        %v1172 = vsub.f32 %v721, %v1122
        %v1173 = vsub.f32 %v726, %v1122
        %v1174 = vsub.f32 %v731, %v1122
        %v1175 = vsub.f32 %v736, %v1122
        %v1176 = vsub.f32 %v741, %v1122
        %v1177 = vsub.f32 %v746, %v1122
        %v1178 = vsub.f32 %v751, %v1122
        %v1179 = vsub.f32 %v756, %v1122
        %v1180 = vsub.f32 %v761, %v1122
        %v1181 = vsub.f32 %v766, %v1122
        %v1182 = vsub.f32 %v771, %v1122
        %v1183 = vsub.f32 %v776, %v1122
        %v1184 = vsub.f32 %v781, %v1122
        %v1185 = vsub.f32 %v786, %v1122
        %v1186 = vsub.f32 %v791, %v1122
        %v1187 = vsub.f32 %v796, %v1122
        %v1188 = vsub.f32 %v801, %v1122
        %v1189 = vsub.f32 %v806, %v1122
        %v1190 = vsub.f32 %v811, %v1122
        %v1191 = vsub.f32 %v816, %v1122
        %v1192 = vsub.f32 %v821, %v1122
        %v1193 = vsub.f32 %v826, %v1122
        %v1194 = vsub.f32 %v831, %v1122
        %v1195 = vsub.f32 %v836, %v1122
        %v1196 = vsub.f32 %v841, %v1122
        %v1197 = vsub.f32 %v846, %v1122
        %v1198 = vsub.f32 %v851, %v1122
        %v1199 = vsub.f32 %v856, %v1122
        %v1200 = vsub.f32 %v861, %v1122
        %v1201 = vsub.f32 %v866, %v1122
        %v1202 = vsub.f32 %v871, %v1122
        %v1203 = vsub.f32 %v876, %v1122
        %v1204 = vsub.f32 %v881, %v1122
        %v1205 = vsub.f32 %v886, %v1122
        %v1206 = vsub.f32 %v891, %v1122
        %v1207 = vsub.f32 %v896, %v1122
        %v1208 = vsub.f32 %v901, %v1122
        %v1209 = vsub.f32 %v906, %v1122
        %v1210 = vsub.f32 %v911, %v1122
        %v1211 = vsub.f32 %v916, %v1122
        %v1212 = vsub.f32 %v921, %v1122
        %v1213 = vsub.f32 %v926, %v1122
        %v1214 = vsub.f32 %v931, %v1122
        %v1215 = vsub.f32 %v936, %v1122
        %v1216 = vsub.f32 %v941, %v1122
        %v1217 = vsub.f32 %v946, %v1122
        %v1218 = vsub.f32 %v951, %v1122
        %v1219 = vsub.f32 %v956, %v1122
        %v1220 = vsub.f32 %v961, %v1122
        %v1221 = vsub.f32 %v966, %v1122
        %v1222 = vsub.f32 %v971, %v1122
        %v1223 = vsub.f32 %v976, %v1122
        %v1224 = vsub.f32 %v981, %v1122
        %v1225 = vsub.f32 %v986, %v1122
        %v1226 = vsub.f32 %v991, %v1122
        %v1227 = vsub.f32 %v996, %v1122
        %v1228 = vsub.f32 %v1001, %v1122
        %v1229 = vsub.f32 %v1006, %v1122
        %v1230 = vsub.f32 %v1011, %v1122
        %v1231 = vsub.f32 %v1016, %v1122
        %v1232 = vsub.f32 %v1021, %v1122
        %v1233 = vsub.f32 %v1026, %v1122
        %v1234 = vsub.f32 %v1031, %v1122
        %v1235 = vsub.f32 %v1036, %v1122
        %v1236 = vsub.f32 %v1041, %v1122
        %v1237 = vsub.f32 %v1046, %v1122
        %v1238 = vsub.f32 %v1051, %v1122
        %v1239 = vsub.f32 %v1056, %v1122
        %v1240 = vsub.f32 %v1061, %v1122
        %v1241 = vsub.f32 %v1066, %v1122
        %v1242 = vsub.f32 %v1071, %v1122
        %v1243 = vsub.f32 %v1076, %v1122
        %v1244 = vsub.f32 %v1081, %v1122
        %v1245 = vsub.f32 %v1086, %v1122
        %v1246 = vsub.f32 %v1091, %v1122
        %v1247 = vsub.f32 %v1096, %v1122
        %v1248 = vsub.f32 %v1101, %v1122
        %v1249 = vsub.f32 %v1106, %v1122
        %v1250 = vsub.f32 %v1111, %v1122
        %v1251 = vsub.f32 %v1116, %v1122
        %v1252 = vld [vmem:[%s3] sm:$0x1]
        %v1253 = vmul.f32 %v1124, %v1124
        %v1254 = vmul.f32 %v1125, %v1125
        %v1255 = vmul.f32 %v1126, %v1126
        %v1256 = vmul.f32 %v1127, %v1127
        %v1257 = vmul.f32 %v1128, %v1128
        %v1258 = vmul.f32 %v1129, %v1129
        %v1259 = vmul.f32 %v1130, %v1130
        %v1260 = vmul.f32 %v1131, %v1131
        %v1261 = vmul.f32 %v1132, %v1132
        %v1262 = vmul.f32 %v1133, %v1133
        %v1263 = vmul.f32 %v1134, %v1134
        %v1264 = vmul.f32 %v1135, %v1135
        %v1265 = vmul.f32 %v1136, %v1136
        %v1266 = vmul.f32 %v1137, %v1137
        %v1267 = vmul.f32 %v1138, %v1138
        %v1268 = vmul.f32 %v1139, %v1139
        %v1269 = vmul.f32 %v1140, %v1140
        %v1270 = vmul.f32 %v1141, %v1141
        %v1271 = vmul.f32 %v1142, %v1142
        %v1272 = vmul.f32 %v1143, %v1143
        %v1273 = vmul.f32 %v1144, %v1144
        %v1274 = vmul.f32 %v1145, %v1145
        %v1275 = vmul.f32 %v1146, %v1146
        %v1276 = vmul.f32 %v1147, %v1147
        %v1277 = vmul.f32 %v1148, %v1148
        %v1278 = vmul.f32 %v1149, %v1149
        %v1279 = vmul.f32 %v1150, %v1150
        %v1280 = vmul.f32 %v1151, %v1151
        %v1281 = vmul.f32 %v1152, %v1152
        %v1282 = vmul.f32 %v1153, %v1153
        %v1283 = vmul.f32 %v1154, %v1154
        %v1284 = vmul.f32 %v1155, %v1155
        %v1285 = vmul.f32 %v1156, %v1156
        %v1286 = vmul.f32 %v1157, %v1157
        %v1287 = vmul.f32 %v1158, %v1158
        %v1288 = vmul.f32 %v1159, %v1159
        %v1289 = vmul.f32 %v1160, %v1160
        %v1290 = vmul.f32 %v1161, %v1161
        %v1291 = vmul.f32 %v1162, %v1162
        %v1292 = vmul.f32 %v1163, %v1163
        %v1293 = vmul.f32 %v1164, %v1164
        %v1294 = vmul.f32 %v1165, %v1165
        %v1295 = vmul.f32 %v1166, %v1166
        %v1296 = vmul.f32 %v1167, %v1167
        %v1297 = vmul.f32 %v1168, %v1168
        %v1298 = vmul.f32 %v1169, %v1169
        %v1299 = vmul.f32 %v1170, %v1170
        %v1300 = vmul.f32 %v1171, %v1171
        %v1301 = vmul.f32 %v1172, %v1172
        %v1302 = vmul.f32 %v1173, %v1173
        %v1303 = vmul.f32 %v1174, %v1174
        %v1304 = vmul.f32 %v1175, %v1175
        %v1305 = vmul.f32 %v1176, %v1176
        %v1306 = vmul.f32 %v1177, %v1177
        %v1307 = vmul.f32 %v1178, %v1178
        %v1308 = vmul.f32 %v1179, %v1179
        %v1309 = vmul.f32 %v1180, %v1180
        %v1310 = vmul.f32 %v1181, %v1181
        %v1311 = vmul.f32 %v1182, %v1182
        %v1312 = vmul.f32 %v1183, %v1183
        %v1313 = vmul.f32 %v1184, %v1184
        %v1314 = vmul.f32 %v1185, %v1185
        %v1315 = vmul.f32 %v1186, %v1186
        %v1316 = vmul.f32 %v1187, %v1187
        %v1317 = vmul.f32 %v1188, %v1188
        %v1318 = vmul.f32 %v1189, %v1189
        %v1319 = vmul.f32 %v1190, %v1190
        %v1320 = vmul.f32 %v1191, %v1191
        %v1321 = vmul.f32 %v1192, %v1192
        %v1322 = vmul.f32 %v1193, %v1193
        %v1323 = vmul.f32 %v1194, %v1194
        %v1324 = vmul.f32 %v1195, %v1195
        %v1325 = vmul.f32 %v1196, %v1196
        %v1326 = vmul.f32 %v1197, %v1197
        %v1327 = vmul.f32 %v1198, %v1198
        %v1328 = vmul.f32 %v1199, %v1199
        %v1329 = vmul.f32 %v1200, %v1200
        %v1330 = vmul.f32 %v1201, %v1201
        %v1331 = vmul.f32 %v1202, %v1202
        %v1332 = vmul.f32 %v1203, %v1203
        %v1333 = vmul.f32 %v1204, %v1204
        %v1334 = vmul.f32 %v1205, %v1205
        %v1335 = vmul.f32 %v1206, %v1206
        %v1336 = vmul.f32 %v1207, %v1207
        %v1337 = vmul.f32 %v1208, %v1208
        %v1338 = vmul.f32 %v1209, %v1209
        %v1339 = vmul.f32 %v1210, %v1210
        %v1340 = vmul.f32 %v1211, %v1211
        %v1341 = vmul.f32 %v1212, %v1212
        %v1342 = vmul.f32 %v1213, %v1213
        %v1343 = vmul.f32 %v1214, %v1214
        %v1344 = vmul.f32 %v1215, %v1215
        %v1345 = vmul.f32 %v1216, %v1216
        %v1346 = vmul.f32 %v1217, %v1217
        %v1347 = vmul.f32 %v1218, %v1218
        %v1348 = vmul.f32 %v1219, %v1219
        %v1349 = vmul.f32 %v1220, %v1220
        %v1350 = vmul.f32 %v1221, %v1221
        %v1351 = vmul.f32 %v1222, %v1222
        %v1352 = vmul.f32 %v1223, %v1223
        %v1353 = vmul.f32 %v1224, %v1224
        %v1354 = vmul.f32 %v1225, %v1225
        %v1355 = vmul.f32 %v1226, %v1226
        %v1356 = vmul.f32 %v1227, %v1227
        %v1357 = vmul.f32 %v1228, %v1228
        %v1358 = vmul.f32 %v1229, %v1229
        %v1359 = vmul.f32 %v1230, %v1230
        %v1360 = vmul.f32 %v1231, %v1231
        %v1361 = vmul.f32 %v1232, %v1232
        %v1362 = vmul.f32 %v1233, %v1233
        %v1363 = vmul.f32 %v1234, %v1234
        %v1364 = vmul.f32 %v1235, %v1235
        %v1365 = vmul.f32 %v1236, %v1236
        %v1366 = vmul.f32 %v1237, %v1237
        %v1367 = vmul.f32 %v1238, %v1238
        %v1368 = vmul.f32 %v1239, %v1239
        %v1369 = vmul.f32 %v1240, %v1240
        %v1370 = vmul.f32 %v1241, %v1241
        %v1371 = vmul.f32 %v1242, %v1242
        %v1372 = vmul.f32 %v1243, %v1243
        %v1373 = vmul.f32 %v1244, %v1244
        %v1374 = vmul.f32 %v1245, %v1245
        %v1375 = vmul.f32 %v1246, %v1246
        %v1376 = vmul.f32 %v1247, %v1247
        %v1377 = vmul.f32 %v1248, %v1248
        %v1378 = vmul.f32 %v1249, %v1249
        %v1379 = vmul.f32 %v1250, %v1250
        %v1380 = vmul.f32 %v1251, %v1251
        %v1382 = vlaneseq
        %v1383 = vshrl.u32 %v1382, 7
        %v1384 = vsub.s32 0, %v1383
        %v1385 = vrot.slane %v1252, %v1384
        %v1387 = vmul.f32 %v1385, %v1253
        %v1388 = vmul.f32 %v1385, %v1254
        %v1389 = vmul.f32 %v1385, %v1255
        %v1390 = vmul.f32 %v1385, %v1256
        %v1391 = vmul.f32 %v1385, %v1257
        %v1392 = vmul.f32 %v1385, %v1258
        %v1393 = vmul.f32 %v1385, %v1259
        %v1394 = vmul.f32 %v1385, %v1260
        %v1395 = vmul.f32 %v1385, %v1261
        %v1396 = vmul.f32 %v1385, %v1262
        %v1397 = vmul.f32 %v1385, %v1263
        %v1398 = vmul.f32 %v1385, %v1264
        %v1399 = vmul.f32 %v1385, %v1265
        %v1400 = vmul.f32 %v1385, %v1266
        %v1401 = vmul.f32 %v1385, %v1267
        %v1402 = vmul.f32 %v1385, %v1268
        %v1403 = vmul.f32 %v1385, %v1269
        %v1404 = vmul.f32 %v1385, %v1270
        %v1405 = vmul.f32 %v1385, %v1271
        %v1406 = vmul.f32 %v1385, %v1272
        %v1407 = vmul.f32 %v1385, %v1273
        %v1408 = vmul.f32 %v1385, %v1274
        %v1409 = vmul.f32 %v1385, %v1275
        %v1410 = vmul.f32 %v1385, %v1276
        %v1411 = vmul.f32 %v1385, %v1277
        %v1412 = vmul.f32 %v1385, %v1278
        %v1413 = vmul.f32 %v1385, %v1279
        %v1414 = vmul.f32 %v1385, %v1280
        %v1415 = vmul.f32 %v1385, %v1281
        %v1416 = vmul.f32 %v1385, %v1282
        %v1417 = vmul.f32 %v1385, %v1283
        %v1418 = vmul.f32 %v1385, %v1284
        %v1419 = vmul.f32 %v1385, %v1285
        %v1420 = vmul.f32 %v1385, %v1286
        %v1421 = vmul.f32 %v1385, %v1287
        %v1422 = vmul.f32 %v1385, %v1288
        %v1423 = vmul.f32 %v1385, %v1289
        %v1424 = vmul.f32 %v1385, %v1290
        %v1425 = vmul.f32 %v1385, %v1291
        %v1426 = vmul.f32 %v1385, %v1292
        %v1427 = vmul.f32 %v1385, %v1293
        %v1428 = vmul.f32 %v1385, %v1294
        %v1429 = vmul.f32 %v1385, %v1295
        %v1430 = vmul.f32 %v1385, %v1296
        %v1431 = vmul.f32 %v1385, %v1297
        %v1432 = vmul.f32 %v1385, %v1298
        %v1433 = vmul.f32 %v1385, %v1299
        %v1434 = vmul.f32 %v1385, %v1300
        %v1435 = vmul.f32 %v1385, %v1301
        %v1436 = vmul.f32 %v1385, %v1302
        %v1437 = vmul.f32 %v1385, %v1303
        %v1438 = vmul.f32 %v1385, %v1304
        %v1439 = vmul.f32 %v1385, %v1305
        %v1440 = vmul.f32 %v1385, %v1306
        %v1441 = vmul.f32 %v1385, %v1307
        %v1442 = vmul.f32 %v1385, %v1308
        %v1443 = vmul.f32 %v1385, %v1309
        %v1444 = vmul.f32 %v1385, %v1310
        %v1445 = vmul.f32 %v1385, %v1311
        %v1446 = vmul.f32 %v1385, %v1312
        %v1447 = vmul.f32 %v1385, %v1313
        %v1448 = vmul.f32 %v1385, %v1314
        %v1449 = vmul.f32 %v1385, %v1315
        %v1450 = vmul.f32 %v1385, %v1316
        %v1451 = vmul.f32 %v1385, %v1317
        %v1452 = vmul.f32 %v1385, %v1318
        %v1453 = vmul.f32 %v1385, %v1319
        %v1454 = vmul.f32 %v1385, %v1320
        %v1455 = vmul.f32 %v1385, %v1321
        %v1456 = vmul.f32 %v1385, %v1322
        %v1457 = vmul.f32 %v1385, %v1323
        %v1458 = vmul.f32 %v1385, %v1324
        %v1459 = vmul.f32 %v1385, %v1325
        %v1460 = vmul.f32 %v1385, %v1326
        %v1461 = vmul.f32 %v1385, %v1327
        %v1462 = vmul.f32 %v1385, %v1328
        %v1463 = vmul.f32 %v1385, %v1329
        %v1464 = vmul.f32 %v1385, %v1330
        %v1465 = vmul.f32 %v1385, %v1331
        %v1466 = vmul.f32 %v1385, %v1332
        %v1467 = vmul.f32 %v1385, %v1333
        %v1468 = vmul.f32 %v1385, %v1334
        %v1469 = vmul.f32 %v1385, %v1335
        %v1470 = vmul.f32 %v1385, %v1336
        %v1471 = vmul.f32 %v1385, %v1337
        %v1472 = vmul.f32 %v1385, %v1338
        %v1473 = vmul.f32 %v1385, %v1339
        %v1474 = vmul.f32 %v1385, %v1340
        %v1475 = vmul.f32 %v1385, %v1341
        %v1476 = vmul.f32 %v1385, %v1342
        %v1477 = vmul.f32 %v1385, %v1343
        %v1478 = vmul.f32 %v1385, %v1344
        %v1479 = vmul.f32 %v1385, %v1345
        %v1480 = vmul.f32 %v1385, %v1346
        %v1481 = vmul.f32 %v1385, %v1347
        %v1482 = vmul.f32 %v1385, %v1348
        %v1483 = vmul.f32 %v1385, %v1349
        %v1484 = vmul.f32 %v1385, %v1350
        %v1485 = vmul.f32 %v1385, %v1351
        %v1486 = vmul.f32 %v1385, %v1352
        %v1487 = vmul.f32 %v1385, %v1353
        %v1488 = vmul.f32 %v1385, %v1354
        %v1489 = vmul.f32 %v1385, %v1355
        %v1490 = vmul.f32 %v1385, %v1356
        %v1491 = vmul.f32 %v1385, %v1357
        %v1492 = vmul.f32 %v1385, %v1358
        %v1493 = vmul.f32 %v1385, %v1359
        %v1494 = vmul.f32 %v1385, %v1360
        %v1495 = vmul.f32 %v1385, %v1361
        %v1496 = vmul.f32 %v1385, %v1362
        %v1497 = vmul.f32 %v1385, %v1363
        %v1498 = vmul.f32 %v1385, %v1364
        %v1499 = vmul.f32 %v1385, %v1365
        %v1500 = vmul.f32 %v1385, %v1366
        %v1501 = vmul.f32 %v1385, %v1367
        %v1502 = vmul.f32 %v1385, %v1368
        %v1503 = vmul.f32 %v1385, %v1369
        %v1504 = vmul.f32 %v1385, %v1370
        %v1505 = vmul.f32 %v1385, %v1371
        %v1506 = vmul.f32 %v1385, %v1372
        %v1507 = vmul.f32 %v1385, %v1373
        %v1508 = vmul.f32 %v1385, %v1374
        %v1509 = vmul.f32 %v1385, %v1375
        %v1510 = vmul.f32 %v1385, %v1376
        %v1511 = vmul.f32 %v1385, %v1377
        %v1512 = vmul.f32 %v1385, %v1378
        %v1513 = vmul.f32 %v1385, %v1379
        %v1514 = vmul.f32 %v1385, %v1380
        %v1515 = vmul.f32 %v1387, 1.442695
        %v1516 = vpow.pop %v1515
        %v1517 = vmul.f32 %v1388, 1.442695
        %v1518 = vpow.pop %v1517
        %v1519 = vmul.f32 %v1389, 1.442695
        %v1520 = vpow.pop %v1519
        %v1521 = vmul.f32 %v1390, 1.442695
        %v1522 = vpow.pop %v1521
        %v1523 = vmul.f32 %v1391, 1.442695
        %v1524 = vpow.pop %v1523
        %v1525 = vmul.f32 %v1392, 1.442695
        %v1526 = vpow.pop %v1525
        %v1527 = vmul.f32 %v1393, 1.442695
        %v1528 = vpow.pop %v1527
        %v1529 = vmul.f32 %v1394, 1.442695
        %v1530 = vpow.pop %v1529
        %v1531 = vmul.f32 %v1395, 1.442695
        %v1532 = vpow.pop %v1531
        %v1533 = vmul.f32 %v1396, 1.442695
        %v1534 = vpow.pop %v1533
        %v1535 = vmul.f32 %v1397, 1.442695
        %v1536 = vpow.pop %v1535
        %v1537 = vmul.f32 %v1398, 1.442695
        %v1538 = vpow.pop %v1537
        %v1539 = vmul.f32 %v1399, 1.442695
        %v1540 = vpow.pop %v1539
        %v1541 = vmul.f32 %v1400, 1.442695
        %v1542 = vpow.pop %v1541
        %v1543 = vmul.f32 %v1401, 1.442695
        %v1544 = vpow.pop %v1543
        %v1545 = vmul.f32 %v1402, 1.442695
        %v1546 = vpow.pop %v1545
        %v1547 = vmul.f32 %v1403, 1.442695
        %v1548 = vpow.pop %v1547
        %v1549 = vmul.f32 %v1404, 1.442695
        %v1550 = vpow.pop %v1549
        %v1551 = vmul.f32 %v1405, 1.442695
        %v1552 = vpow.pop %v1551
        %v1553 = vmul.f32 %v1406, 1.442695
        %v1554 = vpow.pop %v1553
        %v1555 = vmul.f32 %v1407, 1.442695
        %v1556 = vpow.pop %v1555
        %v1557 = vmul.f32 %v1408, 1.442695
        %v1558 = vpow.pop %v1557
        %v1559 = vmul.f32 %v1409, 1.442695
        %v1560 = vpow.pop %v1559
        %v1561 = vmul.f32 %v1410, 1.442695
        %v1562 = vpow.pop %v1561
        %v1563 = vmul.f32 %v1411, 1.442695
        %v1564 = vpow.pop %v1563
        %v1565 = vmul.f32 %v1412, 1.442695
        %v1566 = vpow.pop %v1565
        %v1567 = vmul.f32 %v1413, 1.442695
        %v1568 = vpow.pop %v1567
        %v1569 = vmul.f32 %v1414, 1.442695
        %v1570 = vpow.pop %v1569
        %v1571 = vmul.f32 %v1415, 1.442695
        %v1572 = vpow.pop %v1571
        %v1573 = vmul.f32 %v1416, 1.442695
        %v1574 = vpow.pop %v1573
        %v1575 = vmul.f32 %v1417, 1.442695
        %v1576 = vpow.pop %v1575
        %v1577 = vmul.f32 %v1418, 1.442695
        %v1578 = vpow.pop %v1577
        %v1579 = vmul.f32 %v1419, 1.442695
        %v1580 = vpow.pop %v1579
        %v1581 = vmul.f32 %v1420, 1.442695
        %v1582 = vpow.pop %v1581
        %v1583 = vmul.f32 %v1421, 1.442695
        %v1584 = vpow.pop %v1583
        %v1585 = vmul.f32 %v1422, 1.442695
        %v1586 = vpow.pop %v1585
        %v1587 = vmul.f32 %v1423, 1.442695
        %v1588 = vpow.pop %v1587
        %v1589 = vmul.f32 %v1424, 1.442695
        %v1590 = vpow.pop %v1589
        %v1591 = vmul.f32 %v1425, 1.442695
        %v1592 = vpow.pop %v1591
        %v1593 = vmul.f32 %v1426, 1.442695
        %v1594 = vpow.pop %v1593
        %v1595 = vmul.f32 %v1427, 1.442695
        %v1596 = vpow.pop %v1595
        %v1597 = vmul.f32 %v1428, 1.442695
        %v1598 = vpow.pop %v1597
        %v1599 = vmul.f32 %v1429, 1.442695
        %v1600 = vpow.pop %v1599
        %v1601 = vmul.f32 %v1430, 1.442695
        %v1602 = vpow.pop %v1601
        %v1603 = vmul.f32 %v1431, 1.442695
        %v1604 = vpow.pop %v1603
        %v1605 = vmul.f32 %v1432, 1.442695
        %v1606 = vpow.pop %v1605
        %v1607 = vmul.f32 %v1433, 1.442695
        %v1608 = vpow.pop %v1607
        %v1609 = vmul.f32 %v1434, 1.442695
        %v1610 = vpow.pop %v1609
        %v1611 = vmul.f32 %v1435, 1.442695
        %v1612 = vpow.pop %v1611
        %v1613 = vmul.f32 %v1436, 1.442695
        %v1614 = vpow.pop %v1613
        %v1615 = vmul.f32 %v1437, 1.442695
        %v1616 = vpow.pop %v1615
        %v1617 = vmul.f32 %v1438, 1.442695
        %v1618 = vpow.pop %v1617
        %v1619 = vmul.f32 %v1439, 1.442695
        %v1620 = vpow.pop %v1619
        %v1621 = vmul.f32 %v1440, 1.442695
        %v1622 = vpow.pop %v1621
        %v1623 = vmul.f32 %v1441, 1.442695
        %v1624 = vpow.pop %v1623
        %v1625 = vmul.f32 %v1442, 1.442695
        %v1626 = vpow.pop %v1625
        %v1627 = vmul.f32 %v1443, 1.442695
        %v1628 = vpow.pop %v1627
        %v1629 = vmul.f32 %v1444, 1.442695
        %v1630 = vpow.pop %v1629
        %v1631 = vmul.f32 %v1445, 1.442695
        %v1632 = vpow.pop %v1631
        %v1633 = vmul.f32 %v1446, 1.442695
        %v1634 = vpow.pop %v1633
        %v1635 = vmul.f32 %v1447, 1.442695
        %v1636 = vpow.pop %v1635
        %v1637 = vmul.f32 %v1448, 1.442695
        %v1638 = vpow.pop %v1637
        %v1639 = vmul.f32 %v1449, 1.442695
        %v1640 = vpow.pop %v1639
        %v1641 = vmul.f32 %v1450, 1.442695
        %v1642 = vpow.pop %v1641
        %v1643 = vmul.f32 %v1451, 1.442695
        %v1644 = vpow.pop %v1643
        %v1645 = vmul.f32 %v1452, 1.442695
        %v1646 = vpow.pop %v1645
        %v1647 = vmul.f32 %v1453, 1.442695
        %v1648 = vpow.pop %v1647
        %v1649 = vmul.f32 %v1454, 1.442695
        %v1650 = vpow.pop %v1649
        %v1651 = vmul.f32 %v1455, 1.442695
        %v1652 = vpow.pop %v1651
        %v1653 = vmul.f32 %v1456, 1.442695
        %v1654 = vpow.pop %v1653
        %v1655 = vmul.f32 %v1457, 1.442695
        %v1656 = vpow.pop %v1655
        %v1657 = vmul.f32 %v1458, 1.442695
        %v1658 = vpow.pop %v1657
        %v1659 = vmul.f32 %v1459, 1.442695
        %v1660 = vpow.pop %v1659
        %v1661 = vmul.f32 %v1460, 1.442695
        %v1662 = vpow.pop %v1661
        %v1663 = vmul.f32 %v1461, 1.442695
        %v1664 = vpow.pop %v1663
        %v1665 = vmul.f32 %v1462, 1.442695
        %v1666 = vpow.pop %v1665
        %v1667 = vmul.f32 %v1463, 1.442695
        %v1668 = vpow.pop %v1667
        %v1669 = vmul.f32 %v1464, 1.442695
        %v1670 = vpow.pop %v1669
        %v1671 = vmul.f32 %v1465, 1.442695
        %v1672 = vpow.pop %v1671
        %v1673 = vmul.f32 %v1466, 1.442695
        %v1674 = vpow.pop %v1673
        %v1675 = vmul.f32 %v1467, 1.442695
        %v1676 = vpow.pop %v1675
        %v1677 = vmul.f32 %v1468, 1.442695
        %v1678 = vpow.pop %v1677
        %v1679 = vmul.f32 %v1469, 1.442695
        %v1680 = vpow.pop %v1679
        %v1681 = vmul.f32 %v1470, 1.442695
        %v1682 = vpow.pop %v1681
        %v1683 = vmul.f32 %v1471, 1.442695
        %v1684 = vpow.pop %v1683
        %v1685 = vmul.f32 %v1472, 1.442695
        %v1686 = vpow.pop %v1685
        %v1687 = vmul.f32 %v1473, 1.442695
        %v1688 = vpow.pop %v1687
        %v1689 = vmul.f32 %v1474, 1.442695
        %v1690 = vpow.pop %v1689
        %v1691 = vmul.f32 %v1475, 1.442695
        %v1692 = vpow.pop %v1691
        %v1693 = vmul.f32 %v1476, 1.442695
        %v1694 = vpow.pop %v1693
        %v1695 = vmul.f32 %v1477, 1.442695
        %v1696 = vpow.pop %v1695
        %v1697 = vmul.f32 %v1478, 1.442695
        %v1698 = vpow.pop %v1697
        %v1699 = vmul.f32 %v1479, 1.442695
        %v1700 = vpow.pop %v1699
        %v1701 = vmul.f32 %v1480, 1.442695
        %v1702 = vpow.pop %v1701
        %v1703 = vmul.f32 %v1481, 1.442695
        %v1704 = vpow.pop %v1703
        %v1705 = vmul.f32 %v1482, 1.442695
        %v1706 = vpow.pop %v1705
        %v1707 = vmul.f32 %v1483, 1.442695
        %v1708 = vpow.pop %v1707
        %v1709 = vmul.f32 %v1484, 1.442695
        %v1710 = vpow.pop %v1709
        %v1711 = vmul.f32 %v1485, 1.442695
        %v1712 = vpow.pop %v1711
        %v1713 = vmul.f32 %v1486, 1.442695
        %v1714 = vpow.pop %v1713
        %v1715 = vmul.f32 %v1487, 1.442695
        %v1716 = vpow.pop %v1715
        %v1717 = vmul.f32 %v1488, 1.442695
        %v1718 = vpow.pop %v1717
        %v1719 = vmul.f32 %v1489, 1.442695
        %v1720 = vpow.pop %v1719
        %v1721 = vmul.f32 %v1490, 1.442695
        %v1722 = vpow.pop %v1721
        %v1723 = vmul.f32 %v1491, 1.442695
        %v1724 = vpow.pop %v1723
        %v1725 = vmul.f32 %v1492, 1.442695
        %v1726 = vpow.pop %v1725
        %v1727 = vmul.f32 %v1493, 1.442695
        %v1728 = vpow.pop %v1727
        %v1729 = vmul.f32 %v1494, 1.442695
        %v1730 = vpow.pop %v1729
        %v1731 = vmul.f32 %v1495, 1.442695
        %v1732 = vpow.pop %v1731
        %v1733 = vmul.f32 %v1496, 1.442695
        %v1734 = vpow.pop %v1733
        %v1735 = vmul.f32 %v1497, 1.442695
        %v1736 = vpow.pop %v1735
        %v1737 = vmul.f32 %v1498, 1.442695
        %v1738 = vpow.pop %v1737
        %v1739 = vmul.f32 %v1499, 1.442695
        %v1740 = vpow.pop %v1739
        %v1741 = vmul.f32 %v1500, 1.442695
        %v1742 = vpow.pop %v1741
        %v1743 = vmul.f32 %v1501, 1.442695
        %v1744 = vpow.pop %v1743
        %v1745 = vmul.f32 %v1502, 1.442695
        %v1746 = vpow.pop %v1745
        %v1747 = vmul.f32 %v1503, 1.442695
        %v1748 = vpow.pop %v1747
        %v1749 = vmul.f32 %v1504, 1.442695
        %v1750 = vpow.pop %v1749
        %v1751 = vmul.f32 %v1505, 1.442695
        %v1752 = vpow.pop %v1751
        %v1753 = vmul.f32 %v1506, 1.442695
        %v1754 = vpow.pop %v1753
        %v1755 = vmul.f32 %v1507, 1.442695
        %v1756 = vpow.pop %v1755
        %v1757 = vmul.f32 %v1508, 1.442695
        %v1758 = vpow.pop %v1757
        %v1759 = vmul.f32 %v1509, 1.442695
        %v1760 = vpow.pop %v1759
        %v1761 = vmul.f32 %v1510, 1.442695
        %v1762 = vpow.pop %v1761
        %v1763 = vmul.f32 %v1511, 1.442695
        %v1764 = vpow.pop %v1763
        %v1765 = vmul.f32 %v1512, 1.442695
        %v1766 = vpow.pop %v1765
        %v1767 = vmul.f32 %v1513, 1.442695
        %v1768 = vpow.pop %v1767
        %v1769 = vmul.f32 %v1514, 1.442695
        %v1770 = vpow.pop %v1769
        %1772 = vset.pattern.permute.xlu0 0
        %1773 = vperm.xlu0 %1772, %v221
        %v1774 = vpop.permute.xlu0 %1773
        %1777 = vset.pattern.permute.xlu0 0
        %1778 = vperm.xlu0 %1777, %v222
        %v1779 = vpop.permute.xlu0 %1778
        %1782 = vset.pattern.permute.xlu0 0
        %1783 = vperm.xlu0 %1782, %v223
        %v1784 = vpop.permute.xlu0 %1783
        %1787 = vset.pattern.permute.xlu0 0
        %1788 = vperm.xlu0 %1787, %v224
        %v1789 = vpop.permute.xlu0 %1788
        %1792 = vset.pattern.permute.xlu0 0
        %1793 = vperm.xlu0 %1792, %v225
        %v1794 = vpop.permute.xlu0 %1793
        %1797 = vset.pattern.permute.xlu0 0
        %1798 = vperm.xlu0 %1797, %v226
        %v1799 = vpop.permute.xlu0 %1798
        %1802 = vset.pattern.permute.xlu0 0
        %1803 = vperm.xlu0 %1802, %v227
        %v1804 = vpop.permute.xlu0 %1803
        %1807 = vset.pattern.permute.xlu0 0
        %1808 = vperm.xlu0 %1807, %v228
        %v1809 = vpop.permute.xlu0 %1808
        %1812 = vset.pattern.permute.xlu0 0
        %1813 = vperm.xlu0 %1812, %v229
        %v1814 = vpop.permute.xlu0 %1813
        %1817 = vset.pattern.permute.xlu0 0
        %1818 = vperm.xlu0 %1817, %v230
        %v1819 = vpop.permute.xlu0 %1818
        %1822 = vset.pattern.permute.xlu0 0
        %1823 = vperm.xlu0 %1822, %v231
        %v1824 = vpop.permute.xlu0 %1823
        %1827 = vset.pattern.permute.xlu0 0
        %1828 = vperm.xlu0 %1827, %v232
        %v1829 = vpop.permute.xlu0 %1828
        %1832 = vset.pattern.permute.xlu0 0
        %1833 = vperm.xlu0 %1832, %v233
        %v1834 = vpop.permute.xlu0 %1833
        %1837 = vset.pattern.permute.xlu0 0
        %1838 = vperm.xlu0 %1837, %v234
        %v1839 = vpop.permute.xlu0 %1838
        %1842 = vset.pattern.permute.xlu0 0
        %1843 = vperm.xlu0 %1842, %v235
        %v1844 = vpop.permute.xlu0 %1843
        %1847 = vset.pattern.permute.xlu0 0
        %1848 = vperm.xlu0 %1847, %v236
        %v1849 = vpop.permute.xlu0 %1848
        %1852 = vset.pattern.permute.xlu0 0
        %1853 = vperm.xlu0 %1852, %v237
        %v1854 = vpop.permute.xlu0 %1853
        %1857 = vset.pattern.permute.xlu0 0
        %1858 = vperm.xlu0 %1857, %v238
        %v1859 = vpop.permute.xlu0 %1858
        %1862 = vset.pattern.permute.xlu0 0
        %1863 = vperm.xlu0 %1862, %v239
        %v1864 = vpop.permute.xlu0 %1863
        %1867 = vset.pattern.permute.xlu0 0
        %1868 = vperm.xlu0 %1867, %v240
        %v1869 = vpop.permute.xlu0 %1868
        %1872 = vset.pattern.permute.xlu0 0
        %1873 = vperm.xlu0 %1872, %v241
        %v1874 = vpop.permute.xlu0 %1873
        %1877 = vset.pattern.permute.xlu0 0
        %1878 = vperm.xlu0 %1877, %v242
        %v1879 = vpop.permute.xlu0 %1878
        %1882 = vset.pattern.permute.xlu0 0
        %1883 = vperm.xlu0 %1882, %v243
        %v1884 = vpop.permute.xlu0 %1883
        %1887 = vset.pattern.permute.xlu0 0
        %1888 = vperm.xlu0 %1887, %v244
        %v1889 = vpop.permute.xlu0 %1888
        %1892 = vset.pattern.permute.xlu0 0
        %1893 = vperm.xlu0 %1892, %v245
        %v1894 = vpop.permute.xlu0 %1893
        %1897 = vset.pattern.permute.xlu0 0
        %1898 = vperm.xlu0 %1897, %v246
        %v1899 = vpop.permute.xlu0 %1898
        %1902 = vset.pattern.permute.xlu0 0
        %1903 = vperm.xlu0 %1902, %v247
        %v1904 = vpop.permute.xlu0 %1903
        %1907 = vset.pattern.permute.xlu0 0
        %1908 = vperm.xlu0 %1907, %v248
        %v1909 = vpop.permute.xlu0 %1908
        %1912 = vset.pattern.permute.xlu0 0
        %1913 = vperm.xlu0 %1912, %v249
        %v1914 = vpop.permute.xlu0 %1913
        %1917 = vset.pattern.permute.xlu0 0
        %1918 = vperm.xlu0 %1917, %v250
        %v1919 = vpop.permute.xlu0 %1918
        %1922 = vset.pattern.permute.xlu0 0
        %1923 = vperm.xlu0 %1922, %v251
        %v1924 = vpop.permute.xlu0 %1923
        %1927 = vset.pattern.permute.xlu0 0
        %1928 = vperm.xlu0 %1927, %v252
        %v1929 = vpop.permute.xlu0 %1928
        %1932 = vset.pattern.permute.xlu0 0
        %1933 = vperm.xlu0 %1932, %v253
        %v1934 = vpop.permute.xlu0 %1933
        %1937 = vset.pattern.permute.xlu0 0
        %1938 = vperm.xlu0 %1937, %v254
        %v1939 = vpop.permute.xlu0 %1938
        %1942 = vset.pattern.permute.xlu0 0
        %1943 = vperm.xlu0 %1942, %v255
        %v1944 = vpop.permute.xlu0 %1943
        %1947 = vset.pattern.permute.xlu0 0
        %1948 = vperm.xlu0 %1947, %v256
        %v1949 = vpop.permute.xlu0 %1948
        %1952 = vset.pattern.permute.xlu0 0
        %1953 = vperm.xlu0 %1952, %v257
        %v1954 = vpop.permute.xlu0 %1953
        %1957 = vset.pattern.permute.xlu0 0
        %1958 = vperm.xlu0 %1957, %v258
        %v1959 = vpop.permute.xlu0 %1958
        %1962 = vset.pattern.permute.xlu0 0
        %1963 = vperm.xlu0 %1962, %v259
        %v1964 = vpop.permute.xlu0 %1963
        %1967 = vset.pattern.permute.xlu0 0
        %1968 = vperm.xlu0 %1967, %v260
        %v1969 = vpop.permute.xlu0 %1968
        %1972 = vset.pattern.permute.xlu0 0
        %1973 = vperm.xlu0 %1972, %v261
        %v1974 = vpop.permute.xlu0 %1973
        %1977 = vset.pattern.permute.xlu0 0
        %1978 = vperm.xlu0 %1977, %v262
        %v1979 = vpop.permute.xlu0 %1978
        %1982 = vset.pattern.permute.xlu0 0
        %1983 = vperm.xlu0 %1982, %v263
        %v1984 = vpop.permute.xlu0 %1983
        %1987 = vset.pattern.permute.xlu0 0
        %1988 = vperm.xlu0 %1987, %v264
        %v1989 = vpop.permute.xlu0 %1988
        %1992 = vset.pattern.permute.xlu0 0
        %1993 = vperm.xlu0 %1992, %v265
        %v1994 = vpop.permute.xlu0 %1993
        %1997 = vset.pattern.permute.xlu0 0
        %1998 = vperm.xlu0 %1997, %v266
        %v1999 = vpop.permute.xlu0 %1998
        %2002 = vset.pattern.permute.xlu0 0
        %2003 = vperm.xlu0 %2002, %v267
        %v2004 = vpop.permute.xlu0 %2003
        %2007 = vset.pattern.permute.xlu0 0
        %2008 = vperm.xlu0 %2007, %v268
        %v2009 = vpop.permute.xlu0 %2008
        %2012 = vset.pattern.permute.xlu0 0
        %2013 = vperm.xlu0 %2012, %v269
        %v2014 = vpop.permute.xlu0 %2013
        %2017 = vset.pattern.permute.xlu0 0
        %2018 = vperm.xlu0 %2017, %v270
        %v2019 = vpop.permute.xlu0 %2018
        %2022 = vset.pattern.permute.xlu0 0
        %2023 = vperm.xlu0 %2022, %v271
        %v2024 = vpop.permute.xlu0 %2023
        %2027 = vset.pattern.permute.xlu0 0
        %2028 = vperm.xlu0 %2027, %v272
        %v2029 = vpop.permute.xlu0 %2028
        %2032 = vset.pattern.permute.xlu0 0
        %2033 = vperm.xlu0 %2032, %v273
        %v2034 = vpop.permute.xlu0 %2033
        %2037 = vset.pattern.permute.xlu0 0
        %2038 = vperm.xlu0 %2037, %v274
        %v2039 = vpop.permute.xlu0 %2038
        %2042 = vset.pattern.permute.xlu0 0
        %2043 = vperm.xlu0 %2042, %v275
        %v2044 = vpop.permute.xlu0 %2043
        %2047 = vset.pattern.permute.xlu0 0
        %2048 = vperm.xlu0 %2047, %v276
        %v2049 = vpop.permute.xlu0 %2048
        %2052 = vset.pattern.permute.xlu0 0
        %2053 = vperm.xlu0 %2052, %v277
        %v2054 = vpop.permute.xlu0 %2053
        %2057 = vset.pattern.permute.xlu0 0
        %2058 = vperm.xlu0 %2057, %v278
        %v2059 = vpop.permute.xlu0 %2058
        %2062 = vset.pattern.permute.xlu0 0
        %2063 = vperm.xlu0 %2062, %v279
        %v2064 = vpop.permute.xlu0 %2063
        %2067 = vset.pattern.permute.xlu0 0
        %2068 = vperm.xlu0 %2067, %v280
        %v2069 = vpop.permute.xlu0 %2068
        %2072 = vset.pattern.permute.xlu0 0
        %2073 = vperm.xlu0 %2072, %v281
        %v2074 = vpop.permute.xlu0 %2073
        %2077 = vset.pattern.permute.xlu0 0
        %2078 = vperm.xlu0 %2077, %v282
        %v2079 = vpop.permute.xlu0 %2078
        %2082 = vset.pattern.permute.xlu0 0
        %2083 = vperm.xlu0 %2082, %v283
        %v2084 = vpop.permute.xlu0 %2083
        %2087 = vset.pattern.permute.xlu0 0
        %2088 = vperm.xlu0 %2087, %v284
        %v2089 = vpop.permute.xlu0 %2088
        %2092 = vset.pattern.permute.xlu0 0
        %2093 = vperm.xlu0 %2092, %v285
        %v2094 = vpop.permute.xlu0 %2093
        %2097 = vset.pattern.permute.xlu0 0
        %2098 = vperm.xlu0 %2097, %v286
        %v2099 = vpop.permute.xlu0 %2098
        %2102 = vset.pattern.permute.xlu0 0
        %2103 = vperm.xlu0 %2102, %v287
        %v2104 = vpop.permute.xlu0 %2103
        %2107 = vset.pattern.permute.xlu0 0
        %2108 = vperm.xlu0 %2107, %v288
        %v2109 = vpop.permute.xlu0 %2108
        %2112 = vset.pattern.permute.xlu0 0
        %2113 = vperm.xlu0 %2112, %v289
        %v2114 = vpop.permute.xlu0 %2113
        %2117 = vset.pattern.permute.xlu0 0
        %2118 = vperm.xlu0 %2117, %v290
        %v2119 = vpop.permute.xlu0 %2118
        %2122 = vset.pattern.permute.xlu0 0
        %2123 = vperm.xlu0 %2122, %v291
        %v2124 = vpop.permute.xlu0 %2123
        %2127 = vset.pattern.permute.xlu0 0
        %2128 = vperm.xlu0 %2127, %v292
        %v2129 = vpop.permute.xlu0 %2128
        %2132 = vset.pattern.permute.xlu0 0
        %2133 = vperm.xlu0 %2132, %v293
        %v2134 = vpop.permute.xlu0 %2133
        %2137 = vset.pattern.permute.xlu0 0
        %2138 = vperm.xlu0 %2137, %v294
        %v2139 = vpop.permute.xlu0 %2138
        %2142 = vset.pattern.permute.xlu0 0
        %2143 = vperm.xlu0 %2142, %v295
        %v2144 = vpop.permute.xlu0 %2143
        %2147 = vset.pattern.permute.xlu0 0
        %2148 = vperm.xlu0 %2147, %v296
        %v2149 = vpop.permute.xlu0 %2148
        %2152 = vset.pattern.permute.xlu0 0
        %2153 = vperm.xlu0 %2152, %v297
        %v2154 = vpop.permute.xlu0 %2153
        %2157 = vset.pattern.permute.xlu0 0
        %2158 = vperm.xlu0 %2157, %v298
        %v2159 = vpop.permute.xlu0 %2158
        %2162 = vset.pattern.permute.xlu0 0
        %2163 = vperm.xlu0 %2162, %v299
        %v2164 = vpop.permute.xlu0 %2163
        %2167 = vset.pattern.permute.xlu0 0
        %2168 = vperm.xlu0 %2167, %v300
        %v2169 = vpop.permute.xlu0 %2168
        %2172 = vset.pattern.permute.xlu0 0
        %2173 = vperm.xlu0 %2172, %v301
        %v2174 = vpop.permute.xlu0 %2173
        %2177 = vset.pattern.permute.xlu0 0
        %2178 = vperm.xlu0 %2177, %v302
        %v2179 = vpop.permute.xlu0 %2178
        %2182 = vset.pattern.permute.xlu0 0
        %2183 = vperm.xlu0 %2182, %v303
        %v2184 = vpop.permute.xlu0 %2183
        %2187 = vset.pattern.permute.xlu0 0
        %2188 = vperm.xlu0 %2187, %v304
        %v2189 = vpop.permute.xlu0 %2188
        %2192 = vset.pattern.permute.xlu0 0
        %2193 = vperm.xlu0 %2192, %v305
        %v2194 = vpop.permute.xlu0 %2193
        %2197 = vset.pattern.permute.xlu0 0
        %2198 = vperm.xlu0 %2197, %v306
        %v2199 = vpop.permute.xlu0 %2198
        %2202 = vset.pattern.permute.xlu0 0
        %2203 = vperm.xlu0 %2202, %v307
        %v2204 = vpop.permute.xlu0 %2203
        %2207 = vset.pattern.permute.xlu0 0
        %2208 = vperm.xlu0 %2207, %v308
        %v2209 = vpop.permute.xlu0 %2208
        %2212 = vset.pattern.permute.xlu0 0
        %2213 = vperm.xlu0 %2212, %v309
        %v2214 = vpop.permute.xlu0 %2213
        %2217 = vset.pattern.permute.xlu0 0
        %2218 = vperm.xlu0 %2217, %v310
        %v2219 = vpop.permute.xlu0 %2218
        %2222 = vset.pattern.permute.xlu0 0
        %2223 = vperm.xlu0 %2222, %v311
        %v2224 = vpop.permute.xlu0 %2223
        %2227 = vset.pattern.permute.xlu0 0
        %2228 = vperm.xlu0 %2227, %v312
        %v2229 = vpop.permute.xlu0 %2228
        %2232 = vset.pattern.permute.xlu0 0
        %2233 = vperm.xlu0 %2232, %v313
        %v2234 = vpop.permute.xlu0 %2233
        %2237 = vset.pattern.permute.xlu0 0
        %2238 = vperm.xlu0 %2237, %v314
        %v2239 = vpop.permute.xlu0 %2238
        %2242 = vset.pattern.permute.xlu0 0
        %2243 = vperm.xlu0 %2242, %v315
        %v2244 = vpop.permute.xlu0 %2243
        %2247 = vset.pattern.permute.xlu0 0
        %2248 = vperm.xlu0 %2247, %v316
        %v2249 = vpop.permute.xlu0 %2248
        %2252 = vset.pattern.permute.xlu0 0
        %2253 = vperm.xlu0 %2252, %v317
        %v2254 = vpop.permute.xlu0 %2253
        %2257 = vset.pattern.permute.xlu0 0
        %2258 = vperm.xlu0 %2257, %v318
        %v2259 = vpop.permute.xlu0 %2258
        %2262 = vset.pattern.permute.xlu0 0
        %2263 = vperm.xlu0 %2262, %v319
        %v2264 = vpop.permute.xlu0 %2263
        %2267 = vset.pattern.permute.xlu0 0
        %2268 = vperm.xlu0 %2267, %v320
        %v2269 = vpop.permute.xlu0 %2268
        %2272 = vset.pattern.permute.xlu0 0
        %2273 = vperm.xlu0 %2272, %v321
        %v2274 = vpop.permute.xlu0 %2273
        %2277 = vset.pattern.permute.xlu0 0
        %2278 = vperm.xlu0 %2277, %v322
        %v2279 = vpop.permute.xlu0 %2278
        %2282 = vset.pattern.permute.xlu0 0
        %2283 = vperm.xlu0 %2282, %v323
        %v2284 = vpop.permute.xlu0 %2283
        %2287 = vset.pattern.permute.xlu0 0
        %2288 = vperm.xlu0 %2287, %v324
        %v2289 = vpop.permute.xlu0 %2288
        %2292 = vset.pattern.permute.xlu0 0
        %2293 = vperm.xlu0 %2292, %v325
        %v2294 = vpop.permute.xlu0 %2293
        %2297 = vset.pattern.permute.xlu0 0
        %2298 = vperm.xlu0 %2297, %v326
        %v2299 = vpop.permute.xlu0 %2298
        %2302 = vset.pattern.permute.xlu0 0
        %2303 = vperm.xlu0 %2302, %v327
        %v2304 = vpop.permute.xlu0 %2303
        %2307 = vset.pattern.permute.xlu0 0
        %2308 = vperm.xlu0 %2307, %v328
        %v2309 = vpop.permute.xlu0 %2308
        %2312 = vset.pattern.permute.xlu0 0
        %2313 = vperm.xlu0 %2312, %v329
        %v2314 = vpop.permute.xlu0 %2313
        %2317 = vset.pattern.permute.xlu0 0
        %2318 = vperm.xlu0 %2317, %v330
        %v2319 = vpop.permute.xlu0 %2318
        %2322 = vset.pattern.permute.xlu0 0
        %2323 = vperm.xlu0 %2322, %v331
        %v2324 = vpop.permute.xlu0 %2323
        %2327 = vset.pattern.permute.xlu0 0
        %2328 = vperm.xlu0 %2327, %v332
        %v2329 = vpop.permute.xlu0 %2328
        %2332 = vset.pattern.permute.xlu0 0
        %2333 = vperm.xlu0 %2332, %v333
        %v2334 = vpop.permute.xlu0 %2333
        %2337 = vset.pattern.permute.xlu0 0
        %2338 = vperm.xlu0 %2337, %v334
        %v2339 = vpop.permute.xlu0 %2338
        %2342 = vset.pattern.permute.xlu0 0
        %2343 = vperm.xlu0 %2342, %v335
        %v2344 = vpop.permute.xlu0 %2343
        %2347 = vset.pattern.permute.xlu0 0
        %2348 = vperm.xlu0 %2347, %v336
        %v2349 = vpop.permute.xlu0 %2348
        %2352 = vset.pattern.permute.xlu0 0
        %2353 = vperm.xlu0 %2352, %v337
        %v2354 = vpop.permute.xlu0 %2353
        %2357 = vset.pattern.permute.xlu0 0
        %2358 = vperm.xlu0 %2357, %v338
        %v2359 = vpop.permute.xlu0 %2358
        %2362 = vset.pattern.permute.xlu0 0
        %2363 = vperm.xlu0 %2362, %v339
        %v2364 = vpop.permute.xlu0 %2363
        %2367 = vset.pattern.permute.xlu0 0
        %2368 = vperm.xlu0 %2367, %v340
        %v2369 = vpop.permute.xlu0 %2368
        %2372 = vset.pattern.permute.xlu0 0
        %2373 = vperm.xlu0 %2372, %v341
        %v2374 = vpop.permute.xlu0 %2373
        %2377 = vset.pattern.permute.xlu0 0
        %2378 = vperm.xlu0 %2377, %v342
        %v2379 = vpop.permute.xlu0 %2378
        %2382 = vset.pattern.permute.xlu0 0
        %2383 = vperm.xlu0 %2382, %v343
        %v2384 = vpop.permute.xlu0 %2383
        %2387 = vset.pattern.permute.xlu0 0
        %2388 = vperm.xlu0 %2387, %v344
        %v2389 = vpop.permute.xlu0 %2388
        %2392 = vset.pattern.permute.xlu0 0
        %2393 = vperm.xlu0 %2392, %v345
        %v2394 = vpop.permute.xlu0 %2393
        %2397 = vset.pattern.permute.xlu0 0
        %2398 = vperm.xlu0 %2397, %v346
        %v2399 = vpop.permute.xlu0 %2398
        %2402 = vset.pattern.permute.xlu0 0
        %2403 = vperm.xlu0 %2402, %v347
        %v2404 = vpop.permute.xlu0 %2403
        %2407 = vset.pattern.permute.xlu0 0
        %2408 = vperm.xlu0 %2407, %v348
        %v2409 = vpop.permute.xlu0 %2408
        %v2411 = vmul.f32 %v1774, %v1516
        %v2412 = vmul.f32 %v1779, %v1518
        %v2413 = vmul.f32 %v1784, %v1520
        %v2414 = vmul.f32 %v1789, %v1522
        %v2415 = vmul.f32 %v1794, %v1524
        %v2416 = vmul.f32 %v1799, %v1526
        %v2417 = vmul.f32 %v1804, %v1528
        %v2418 = vmul.f32 %v1809, %v1530
        %v2419 = vmul.f32 %v1814, %v1532
        %v2420 = vmul.f32 %v1819, %v1534
        %v2421 = vmul.f32 %v1824, %v1536
        %v2422 = vmul.f32 %v1829, %v1538
        %v2423 = vmul.f32 %v1834, %v1540
        %v2424 = vmul.f32 %v1839, %v1542
        %v2425 = vmul.f32 %v1844, %v1544
        %v2426 = vmul.f32 %v1849, %v1546
        %v2427 = vmul.f32 %v1854, %v1548
        %v2428 = vmul.f32 %v1859, %v1550
        %v2429 = vmul.f32 %v1864, %v1552
        %v2430 = vmul.f32 %v1869, %v1554
        %v2431 = vmul.f32 %v1874, %v1556
        %v2432 = vmul.f32 %v1879, %v1558
        %v2433 = vmul.f32 %v1884, %v1560
        %v2434 = vmul.f32 %v1889, %v1562
        %v2435 = vmul.f32 %v1894, %v1564
        %v2436 = vmul.f32 %v1899, %v1566
        %v2437 = vmul.f32 %v1904, %v1568
        %v2438 = vmul.f32 %v1909, %v1570
        %v2439 = vmul.f32 %v1914, %v1572
        %v2440 = vmul.f32 %v1919, %v1574
        %v2441 = vmul.f32 %v1924, %v1576
        %v2442 = vmul.f32 %v1929, %v1578
        %v2443 = vmul.f32 %v1934, %v1580
        %v2444 = vmul.f32 %v1939, %v1582
        %v2445 = vmul.f32 %v1944, %v1584
        %v2446 = vmul.f32 %v1949, %v1586
        %v2447 = vmul.f32 %v1954, %v1588
        %v2448 = vmul.f32 %v1959, %v1590
        %v2449 = vmul.f32 %v1964, %v1592
        %v2450 = vmul.f32 %v1969, %v1594
        %v2451 = vmul.f32 %v1974, %v1596
        %v2452 = vmul.f32 %v1979, %v1598
        %v2453 = vmul.f32 %v1984, %v1600
        %v2454 = vmul.f32 %v1989, %v1602
        %v2455 = vmul.f32 %v1994, %v1604
        %v2456 = vmul.f32 %v1999, %v1606
        %v2457 = vmul.f32 %v2004, %v1608
        %v2458 = vmul.f32 %v2009, %v1610
        %v2459 = vmul.f32 %v2014, %v1612
        %v2460 = vmul.f32 %v2019, %v1614
        %v2461 = vmul.f32 %v2024, %v1616
        %v2462 = vmul.f32 %v2029, %v1618
        %v2463 = vmul.f32 %v2034, %v1620
        %v2464 = vmul.f32 %v2039, %v1622
        %v2465 = vmul.f32 %v2044, %v1624
        %v2466 = vmul.f32 %v2049, %v1626
        %v2467 = vmul.f32 %v2054, %v1628
        %v2468 = vmul.f32 %v2059, %v1630
        %v2469 = vmul.f32 %v2064, %v1632
        %v2470 = vmul.f32 %v2069, %v1634
        %v2471 = vmul.f32 %v2074, %v1636
        %v2472 = vmul.f32 %v2079, %v1638
        %v2473 = vmul.f32 %v2084, %v1640
        %v2474 = vmul.f32 %v2089, %v1642
        %v2475 = vmul.f32 %v2094, %v1644
        %v2476 = vmul.f32 %v2099, %v1646
        %v2477 = vmul.f32 %v2104, %v1648
        %v2478 = vmul.f32 %v2109, %v1650
        %v2479 = vmul.f32 %v2114, %v1652
        %v2480 = vmul.f32 %v2119, %v1654
        %v2481 = vmul.f32 %v2124, %v1656
        %v2482 = vmul.f32 %v2129, %v1658
        %v2483 = vmul.f32 %v2134, %v1660
        %v2484 = vmul.f32 %v2139, %v1662
        %v2485 = vmul.f32 %v2144, %v1664
        %v2486 = vmul.f32 %v2149, %v1666
        %v2487 = vmul.f32 %v2154, %v1668
        %v2488 = vmul.f32 %v2159, %v1670
        %v2489 = vmul.f32 %v2164, %v1672
        %v2490 = vmul.f32 %v2169, %v1674
        %v2491 = vmul.f32 %v2174, %v1676
        %v2492 = vmul.f32 %v2179, %v1678
        %v2493 = vmul.f32 %v2184, %v1680
        %v2494 = vmul.f32 %v2189, %v1682
        %v2495 = vmul.f32 %v2194, %v1684
        %v2496 = vmul.f32 %v2199, %v1686
        %v2497 = vmul.f32 %v2204, %v1688
        %v2498 = vmul.f32 %v2209, %v1690
        %v2499 = vmul.f32 %v2214, %v1692
        %v2500 = vmul.f32 %v2219, %v1694
        %v2501 = vmul.f32 %v2224, %v1696
        %v2502 = vmul.f32 %v2229, %v1698
        %v2503 = vmul.f32 %v2234, %v1700
        %v2504 = vmul.f32 %v2239, %v1702
        %v2505 = vmul.f32 %v2244, %v1704
        %v2506 = vmul.f32 %v2249, %v1706
        %v2507 = vmul.f32 %v2254, %v1708
        %v2508 = vmul.f32 %v2259, %v1710
        %v2509 = vmul.f32 %v2264, %v1712
        %v2510 = vmul.f32 %v2269, %v1714
        %v2511 = vmul.f32 %v2274, %v1716
        %v2512 = vmul.f32 %v2279, %v1718
        %v2513 = vmul.f32 %v2284, %v1720
        %v2514 = vmul.f32 %v2289, %v1722
        %v2515 = vmul.f32 %v2294, %v1724
        %v2516 = vmul.f32 %v2299, %v1726
        %v2517 = vmul.f32 %v2304, %v1728
        %v2518 = vmul.f32 %v2309, %v1730
        %v2519 = vmul.f32 %v2314, %v1732
        %v2520 = vmul.f32 %v2319, %v1734
        %v2521 = vmul.f32 %v2324, %v1736
        %v2522 = vmul.f32 %v2329, %v1738
        %v2523 = vmul.f32 %v2334, %v1740
        %v2524 = vmul.f32 %v2339, %v1742
        %v2525 = vmul.f32 %v2344, %v1744
        %v2526 = vmul.f32 %v2349, %v1746
        %v2527 = vmul.f32 %v2354, %v1748
        %v2528 = vmul.f32 %v2359, %v1750
        %v2529 = vmul.f32 %v2364, %v1752
        %v2530 = vmul.f32 %v2369, %v1754
        %v2531 = vmul.f32 %v2374, %v1756
        %v2532 = vmul.f32 %v2379, %v1758
        %v2533 = vmul.f32 %v2384, %v1760
        %v2534 = vmul.f32 %v2389, %v1762
        %v2535 = vmul.f32 %v2394, %v1764
        %v2536 = vmul.f32 %v2399, %v1766
        %v2537 = vmul.f32 %v2404, %v1768
        %v2538 = vmul.f32 %v2409, %v1770
        %2539 = vst [vmem:[%s207] sm:$0xff] %v2411
        %2540 = vst [vmem:[%s207 + $0x8] sm:$0xff] %v2412
        %2541 = vst [vmem:[%s207 + $0x10] sm:$0xff] %v2413
        %2542 = vst [vmem:[%s207 + $0x18] sm:$0xff] %v2414
        %2543 = vst [vmem:[%s207 + $0x20] sm:$0xff] %v2415
        %2544 = vst [vmem:[%s207 + $0x28] sm:$0xff] %v2416
        %2545 = vst [vmem:[%s207 + $0x30] sm:$0xff] %v2417
        %2546 = vst [vmem:[%s207 + $0x38] sm:$0xff] %v2418
        %2547 = vst [vmem:[%s207 + $0x40] sm:$0xff] %v2419
        %2548 = vst [vmem:[%s207 + $0x48] sm:$0xff] %v2420
        %2549 = vst [vmem:[%s207 + $0x50] sm:$0xff] %v2421
        %2550 = vst [vmem:[%s207 + $0x58] sm:$0xff] %v2422
        %2551 = vst [vmem:[%s207 + $0x60] sm:$0xff] %v2423
        %2552 = vst [vmem:[%s207 + $0x68] sm:$0xff] %v2424
        %2553 = vst [vmem:[%s207 + $0x70] sm:$0xff] %v2425
        %2554 = vst [vmem:[%s207 + $0x78] sm:$0xff] %v2426
        %2555 = vst [vmem:[%s207 + $0x80] sm:$0xff] %v2427
        %2556 = vst [vmem:[%s207 + $0x88] sm:$0xff] %v2428
        %2557 = vst [vmem:[%s207 + $0x90] sm:$0xff] %v2429
        %2558 = vst [vmem:[%s207 + $0x98] sm:$0xff] %v2430
        %2559 = vst [vmem:[%s207 + $0xa0] sm:$0xff] %v2431
        %2560 = vst [vmem:[%s207 + $0xa8] sm:$0xff] %v2432
        %2561 = vst [vmem:[%s207 + $0xb0] sm:$0xff] %v2433
        %2562 = vst [vmem:[%s207 + $0xb8] sm:$0xff] %v2434
        %2563 = vst [vmem:[%s207 + $0xc0] sm:$0xff] %v2435
        %2564 = vst [vmem:[%s207 + $0xc8] sm:$0xff] %v2436
        %2565 = vst [vmem:[%s207 + $0xd0] sm:$0xff] %v2437
        %2566 = vst [vmem:[%s207 + $0xd8] sm:$0xff] %v2438
        %2567 = vst [vmem:[%s207 + $0xe0] sm:$0xff] %v2439
        %2568 = vst [vmem:[%s207 + $0xe8] sm:$0xff] %v2440
        %2569 = vst [vmem:[%s207 + $0xf0] sm:$0xff] %v2441
        %2570 = vst [vmem:[%s207 + $0xf8] sm:$0xff] %v2442
        %2571 = vst [vmem:[%s207 + $0x100] sm:$0xff] %v2443
        %2572 = vst [vmem:[%s207 + $0x108] sm:$0xff] %v2444
        %2573 = vst [vmem:[%s207 + $0x110] sm:$0xff] %v2445
        %2574 = vst [vmem:[%s207 + $0x118] sm:$0xff] %v2446
        %2575 = vst [vmem:[%s207 + $0x120] sm:$0xff] %v2447
        %2576 = vst [vmem:[%s207 + $0x128] sm:$0xff] %v2448
        %2577 = vst [vmem:[%s207 + $0x130] sm:$0xff] %v2449
        %2578 = vst [vmem:[%s207 + $0x138] sm:$0xff] %v2450
        %2579 = vst [vmem:[%s207 + $0x140] sm:$0xff] %v2451
        %2580 = vst [vmem:[%s207 + $0x148] sm:$0xff] %v2452
        %2581 = vst [vmem:[%s207 + $0x150] sm:$0xff] %v2453
        %2582 = vst [vmem:[%s207 + $0x158] sm:$0xff] %v2454
        %2583 = vst [vmem:[%s207 + $0x160] sm:$0xff] %v2455
        %2584 = vst [vmem:[%s207 + $0x168] sm:$0xff] %v2456
        %2585 = vst [vmem:[%s207 + $0x170] sm:$0xff] %v2457
        %2586 = vst [vmem:[%s207 + $0x178] sm:$0xff] %v2458
        %2587 = vst [vmem:[%s207 + $0x180] sm:$0xff] %v2459
        %2588 = vst [vmem:[%s207 + $0x188] sm:$0xff] %v2460
        %2589 = vst [vmem:[%s207 + $0x190] sm:$0xff] %v2461
        %2590 = vst [vmem:[%s207 + $0x198] sm:$0xff] %v2462
        %2591 = vst [vmem:[%s207 + $0x1a0] sm:$0xff] %v2463
        %2592 = vst [vmem:[%s207 + $0x1a8] sm:$0xff] %v2464
        %2593 = vst [vmem:[%s207 + $0x1b0] sm:$0xff] %v2465
        %2594 = vst [vmem:[%s207 + $0x1b8] sm:$0xff] %v2466
        %2595 = vst [vmem:[%s207 + $0x1c0] sm:$0xff] %v2467
        %2596 = vst [vmem:[%s207 + $0x1c8] sm:$0xff] %v2468
        %2597 = vst [vmem:[%s207 + $0x1d0] sm:$0xff] %v2469
        %2598 = vst [vmem:[%s207 + $0x1d8] sm:$0xff] %v2470
        %2599 = vst [vmem:[%s207 + $0x1e0] sm:$0xff] %v2471
        %2600 = vst [vmem:[%s207 + $0x1e8] sm:$0xff] %v2472
        %2601 = vst [vmem:[%s207 + $0x1f0] sm:$0xff] %v2473
        %2602 = vst [vmem:[%s207 + $0x1f8] sm:$0xff] %v2474
        %2603 = vst [vmem:[%s207 + $0x200] sm:$0xff] %v2475
        %2604 = vst [vmem:[%s207 + $0x208] sm:$0xff] %v2476
        %2605 = vst [vmem:[%s207 + $0x210] sm:$0xff] %v2477
        %2606 = vst [vmem:[%s207 + $0x218] sm:$0xff] %v2478
        %2607 = vst [vmem:[%s207 + $0x220] sm:$0xff] %v2479
        %2608 = vst [vmem:[%s207 + $0x228] sm:$0xff] %v2480
        %2609 = vst [vmem:[%s207 + $0x230] sm:$0xff] %v2481
        %2610 = vst [vmem:[%s207 + $0x238] sm:$0xff] %v2482
        %2611 = vst [vmem:[%s207 + $0x240] sm:$0xff] %v2483
        %2612 = vst [vmem:[%s207 + $0x248] sm:$0xff] %v2484
        %2613 = vst [vmem:[%s207 + $0x250] sm:$0xff] %v2485
        %2614 = vst [vmem:[%s207 + $0x258] sm:$0xff] %v2486
        %2615 = vst [vmem:[%s207 + $0x260] sm:$0xff] %v2487
        %2616 = vst [vmem:[%s207 + $0x268] sm:$0xff] %v2488
        %2617 = vst [vmem:[%s207 + $0x270] sm:$0xff] %v2489
        %2618 = vst [vmem:[%s207 + $0x278] sm:$0xff] %v2490
        %2619 = vst [vmem:[%s207 + $0x280] sm:$0xff] %v2491
        %2620 = vst [vmem:[%s207 + $0x288] sm:$0xff] %v2492
        %2621 = vst [vmem:[%s207 + $0x290] sm:$0xff] %v2493
        %2622 = vst [vmem:[%s207 + $0x298] sm:$0xff] %v2494
        %2623 = vst [vmem:[%s207 + $0x2a0] sm:$0xff] %v2495
        %2624 = vst [vmem:[%s207 + $0x2a8] sm:$0xff] %v2496
        %2625 = vst [vmem:[%s207 + $0x2b0] sm:$0xff] %v2497
        %2626 = vst [vmem:[%s207 + $0x2b8] sm:$0xff] %v2498
        %2627 = vst [vmem:[%s207 + $0x2c0] sm:$0xff] %v2499
        %2628 = vst [vmem:[%s207 + $0x2c8] sm:$0xff] %v2500
        %2629 = vst [vmem:[%s207 + $0x2d0] sm:$0xff] %v2501
        %2630 = vst [vmem:[%s207 + $0x2d8] sm:$0xff] %v2502
        %2631 = vst [vmem:[%s207 + $0x2e0] sm:$0xff] %v2503
        %2632 = vst [vmem:[%s207 + $0x2e8] sm:$0xff] %v2504
        %2633 = vst [vmem:[%s207 + $0x2f0] sm:$0xff] %v2505
        %2634 = vst [vmem:[%s207 + $0x2f8] sm:$0xff] %v2506
        %2635 = vst [vmem:[%s207 + $0x300] sm:$0xff] %v2507
        %2636 = vst [vmem:[%s207 + $0x308] sm:$0xff] %v2508
        %2637 = vst [vmem:[%s207 + $0x310] sm:$0xff] %v2509
        %2638 = vst [vmem:[%s207 + $0x318] sm:$0xff] %v2510
        %2639 = vst [vmem:[%s207 + $0x320] sm:$0xff] %v2511
        %2640 = vst [vmem:[%s207 + $0x328] sm:$0xff] %v2512
        %2641 = vst [vmem:[%s207 + $0x330] sm:$0xff] %v2513
        %2642 = vst [vmem:[%s207 + $0x338] sm:$0xff] %v2514
        %2643 = vst [vmem:[%s207 + $0x340] sm:$0xff] %v2515
        %2644 = vst [vmem:[%s207 + $0x348] sm:$0xff] %v2516
        %2645 = vst [vmem:[%s207 + $0x350] sm:$0xff] %v2517
        %2646 = vst [vmem:[%s207 + $0x358] sm:$0xff] %v2518
        %2647 = vst [vmem:[%s207 + $0x360] sm:$0xff] %v2519
        %2648 = vst [vmem:[%s207 + $0x368] sm:$0xff] %v2520
        %2649 = vst [vmem:[%s207 + $0x370] sm:$0xff] %v2521
        %2650 = vst [vmem:[%s207 + $0x378] sm:$0xff] %v2522
        %2651 = vst [vmem:[%s207 + $0x380] sm:$0xff] %v2523
        %2652 = vst [vmem:[%s207 + $0x388] sm:$0xff] %v2524
        %2653 = vst [vmem:[%s207 + $0x390] sm:$0xff] %v2525
        %2654 = vst [vmem:[%s207 + $0x398] sm:$0xff] %v2526
        %2655 = vst [vmem:[%s207 + $0x3a0] sm:$0xff] %v2527
        %2656 = vst [vmem:[%s207 + $0x3a8] sm:$0xff] %v2528
        %2657 = vst [vmem:[%s207 + $0x3b0] sm:$0xff] %v2529
        %2658 = vst [vmem:[%s207 + $0x3b8] sm:$0xff] %v2530
        %2659 = vst [vmem:[%s207 + $0x3c0] sm:$0xff] %v2531
        %2660 = vst [vmem:[%s207 + $0x3c8] sm:$0xff] %v2532
        %2661 = vst [vmem:[%s207 + $0x3d0] sm:$0xff] %v2533
        %2662 = vst [vmem:[%s207 + $0x3d8] sm:$0xff] %v2534
        %2663 = vst [vmem:[%s207 + $0x3e0] sm:$0xff] %v2535
        %2664 = vst [vmem:[%s207 + $0x3e8] sm:$0xff] %v2536
        %2665 = vst [vmem:[%s207 + $0x3f0] sm:$0xff] %v2537
        %2666 = vst [vmem:[%s207 + $0x3f8] sm:$0xff] %v2538
        %s2667 = sand.u32 %s120, 1
        %s2668 = scalar_lea.sflag [#allocation3], %s2667
        %s2669 = sand.u32 %s120, 1
        %s2670 = smul.addr %s2669, 1024
        %s2671 = scalar_lea.vmem [#allocation2], %s2670
        // Predicated region
        $region37: #{tpu_custom_call.1} parent=35 // pred_check
          %p2672 = pneg %p130
        $region38: #{tpu_custom_call.1} parent=35 // pred_check_branch
          %2674 = sbr.rel (%p2672) target = $region40
        $region39: #{tpu_custom_call.1} parent=35 // pred_region
          %s2675 = smul.u32 128, %s18
          %s2677 = ssub.s32 16384, 16384
          %2678 = vsyncadd %s2668, %s2677
          %s2679 = smul.addr %s2675, 128
          %s2680 = scalar_lea.hbm %s4, %s2679
          %s2681 = sshll.u32 %s2671, 4
          %s2682 = int_to_ptr.vmem [resolvable:$true] %s2681
          %2687 = dma.vmem_to_hbm [thread:$0]  %s2682, 16384, %s2680, %s2668, 128, 128, 8
        $region40: #{tpu_custom_call.1} parent=35 // pred_fallthru
          _
      $region36: #{tpu_custom_call.1} parent=5 // pred_fallthru
        _
      %p2688 = scmp.le.s32.totalorder 2, %s13
      // Predicated region
      $region41: #{tpu_custom_call.1} parent=5 // pred_check
        %p2689 = pneg %p2688
      $region42: #{tpu_custom_call.1} parent=5 // pred_check_branch
        %2691 = sbr.rel (%p2689) target = $region44
      $region43: #{tpu_custom_call.1} parent=5 // pred_region
        %s2692 = ssub.s32 %s13, 2
        // Predicated region
        $region45: #{tpu_custom_call.1} parent=43 // pred_check
          %p2693 = pneg %p136
        $region46: #{tpu_custom_call.1} parent=43 // pred_check_branch
          %2695 = sbr.rel (%p2693) target = $region48
        $region47: #{tpu_custom_call.1} parent=43 // pred_region
          %s2696 = sand.u32 %s121, 1
          %s2697 = scalar_lea.sflag [#allocation3], %s2696
          %s2698 = sand.u32 %s121, 1
          %s2699 = smul.addr %s2698, 1024
          %s2700 = scalar_lea.vmem [#allocation2], %s2699
          %2701 = dma.done %s2697, 16384
        $region48: #{tpu_custom_call.1} parent=43 // pred_fallthru
          _
      $region44: #{tpu_custom_call.1} parent=5 // pred_fallthru
        _
    $region6: #{tpu_custom_call.1} parent=1 // loop_footer
      %s17 = sadd.s32 1, %s13
    $region7: #{tpu_custom_call.1} parent=1 // loop_footer_branch
      %12 = sbr.rel target = $region3
    $region8: #{tpu_custom_call.1} parent=1 // loop_exit
      _
    %2702 = vsyncpa [#allocation3], 1
    %s2703 = scalar_lea.sflag [#allocation3], 1
    %2704 = vsyncpa %s2703, 1

</llo_original>
